<compile_context>
chip_gen: v7x
topology: tpu7x:2x2x1
jax: 0.10.0
libtpu: 0.0.40
codegen_flags: <defaults>
</compile_context>

<pallas_src>
import functools

import jax
import jax.numpy as jnp
from jax.experimental import pallas as pl
from jax.experimental.pallas import tpu as pltpu


# ---------------------------------------------------------------------------
# small helpers
# ---------------------------------------------------------------------------
def _round_up(n, m):
    return ((n + m - 1) // m) * m


def _pad_axis(x, axis, target):
    pad = target - x.shape[axis]
    if pad <= 0:
        return x
    widths = [(0, 0)] * x.ndim
    widths[axis] = (0, pad)
    return jnp.pad(x, widths)


def _tile(dim, cap, align):
    """Largest tile <= cap (multiple of `align`) that evenly divides dim."""
    assert dim % align == 0, (dim, align)
    if dim <= cap:
        return dim
    d = (cap // align) * align
    while d >= align:
        if dim % d == 0:
            return d
        d -= align
    return align  # unreachable: `align` always divides dim


# ---------------------------------------------------------------------------
# Pallas kernels: tiled linear
# ---------------------------------------------------------------------------
def _linear_tiled_kernel(x_ref, w_ref, b_ref, o_ref, acc_ref, *, relu):
    """One (tm, tn) output tile; K is the innermost ('arbitrary') grid axis."""
    k = pl.program_id(2)

    @pl.when(k == 0)
    def _():
        acc_ref[...] = jnp.zeros_like(acc_ref)

    acc_ref[...] += jnp.dot(x_ref[...], w_ref[...],
                            preferred_element_type=jnp.float32)

    @pl.when(k == pl.num_programs(2) - 1)
    def _():
        y = acc_ref[...] + b_ref[...]
        if relu:
            y = jnp.maximum(y, 0.0)
        o_ref[...] = y.astype(o_ref.dtype)


def _linear_single_k_kernel(x_ref, w_ref, b_ref, o_ref, *, relu):
    """Single-K-step fast path: no accumulator scratch, no zero-fill/copy."""
    y = jnp.dot(x_ref[...], w_ref[...],
                preferred_element_type=jnp.float32) + b_ref[...]
    if relu:
        y = jnp.maximum(y, 0.0)
    o_ref[...] = y.astype(o_ref.dtype)


def pallas_linear(x, w, b, *, relu=False, out_dtype=jnp.float32,
                  tm_cap=256, tn_cap=512, tk_cap=512):
    """y = x @ w + b (optionally ReLU).  w is (K, N) pre-transposed bf16,
    b is (N,) f32.  Tiled over (M, N[, K]); accumulation in f32."""
    M, K = x.shape
    K2, N = w.shape
    assert K == K2, (K, K2)
    assert M % 8 == 0 and K % 128 == 0 and N % 128 == 0, (M, K, N)

    tm = _tile(M, tm_cap, 16 if M % 16 == 0 else 8)   # bf16 sublane packing
    tn = _tile(N, tn_cap, 128)
    tk = _tile(K, tk_cap, 128)
    assert M % tm == 0 and N % tn == 0 and K % tk == 0, (M, N, K, tm, tn, tk)

    x = x.astype(w.dtype)                      # no-op when producer is bf16
    b2 = b.reshape(1, N).astype(jnp.float32)   # f32 bias

    flops = 2 * M * N * K
    bytes_acc = (M * K * jnp.dtype(w.dtype).itemsize
                 + K * N * jnp.dtype(w.dtype).itemsize
                 + M * N * jnp.dtype(out_dtype).itemsize + N * 4)
    cost = pl.CostEstimate(flops=flops, transcendentals=0,
                           bytes_accessed=bytes_acc)

    nk = K // tk
    if nk == 1:
        return pl.pallas_call(
            functools.partial(_linear_single_k_kernel, relu=relu),
            out_shape=jax.ShapeDtypeStruct((M, N), out_dtype),
            grid=(M // tm, N // tn),
            in_specs=[
                pl.BlockSpec((tm, K), lambda i, j: (i, 0)),
                pl.BlockSpec((K, tn), lambda i, j: (0, j)),
                pl.BlockSpec((1, tn), lambda i, j: (0, j)),
            ],
            out_specs=pl.BlockSpec((tm, tn), lambda i, j: (i, j)),
            compiler_params=pltpu.CompilerParams(
                dimension_semantics=("parallel", "parallel")),
            cost_estimate=cost,
        )(x, w, b2)

    return pl.pallas_call(
        functools.partial(_linear_tiled_kernel, relu=relu),
        out_shape=jax.ShapeDtypeStruct((M, N), out_dtype),
        grid=(M // tm, N // tn, nk),
        in_specs=[
            pl.BlockSpec((tm, tk), lambda i, j, k: (i, k)),
            pl.BlockSpec((tk, tn), lambda i, j, k: (k, j)),
            pl.BlockSpec((1, tn), lambda i, j, k: (0, j)),
        ],
        out_specs=pl.BlockSpec((tm, tn), lambda i, j, k: (i, j)),
        scratch_shapes=[pltpu.VMEM((tm, tn), jnp.float32)],
        compiler_params=pltpu.CompilerParams(
            dimension_semantics=("parallel", "parallel", "arbitrary")),
        cost_estimate=cost,
    )(x, w, b2)


# ---------------------------------------------------------------------------
# Pallas kernel: fused LSTM layer (input projection + recurrence), chunked T
# ---------------------------------------------------------------------------
def _lstm_chunk_kernel(x_ref, w_ih_ref, w_hh_ref, b_ref, hseq_ref,
                       h_scr, c_scr, gx_scr, *, hidden):
    """One (Tc, Bblk) chunk of the sequence.

    x_ref   : (Tc, Bblk, In) bf16   layer input chunk
    w_ih_ref: (In, 4H)       bf16   input weight, pre-transposed
    w_hh_ref: (H, 4H)        bf16   recurrent weight, pre-transposed
    b_ref   : (1, 4H)        f32    b_ih + b_hh
    hseq_ref: (Tc, Bblk, H)  bf16   output hidden chunk
    h_scr/c_scr: (Bblk, H)   f32    carried state (VMEM scratch persists
                                    across grid steps; reset at ti == 0)
    gx_scr  : (Tc, Bblk, 4H) f32    chunk's precomputed x @ W_ih + b
    """
    ti = pl.program_id(1)

    @pl.when(ti == 0)
    def _():
        h_scr[...] = jnp.zeros_like(h_scr)
        c_scr[...] = jnp.zeros_like(c_scr)

    Tc, Bb, In = x_ref.shape
    H = hidden

    # Chunk input projection on the MXU (f32 accumulation), kept in VMEM so
    # the (T*B, 4H) gates tensor never touches HBM.
    gx = jnp.dot(x_ref[...].reshape(Tc * Bb, In), w_ih_ref[...],
                 preferred_element_type=jnp.float32)
    gx_scr[...] = (gx + b_ref[...]).reshape(Tc, Bb, 4 * H)

    @pl.loop(0, Tc)
    def _(t):
        gates = gx_scr[t] + jnp.dot(
            h_scr[...].astype(w_hh_ref.dtype), w_hh_ref[...],
            preferred_element_type=jnp.float32)            # (Bb, 4H) f32
        # PyTorch gate order: input, forget, cell(g), output — lane-aligned
        # slices because H is padded to a multiple of 128.
        i = jax.nn.sigmoid(gates[:, 0 * H:1 * H])
        f = jax.nn.sigmoid(gates[:, 1 * H:2 * H])
        g = jnp.tanh(gates[:, 2 * H:3 * H])
        o = jax.nn.sigmoid(gates[:, 3 * H:4 * H])
        c = f * c_scr[...] + i * g
        h = o * jnp.tanh(c)
        c_scr[...] = c
        h_scr[...] = h
        hseq_ref[t] = h.astype(hseq_ref.dtype)


def pallas_lstm_layer(x_seq, w_ih_t, w_hh_t, b, *, chunk_budget_bytes=8 << 20):
    """x_seq: (T, B, in) bf16 -> h_seq: (T_pad, B, H) bf16.  Zero initial state.

    The time axis is chunked through the grid so VMEM stays bounded and the
    x/hseq DMAs double-buffer behind the recurrence.  Extra padded timesteps
    (appended at the end) are causally inert and are sliced off by the caller.
    """
    Tseq, Bp, In = x_seq.shape
    H = w_hh_t.shape[0]
    G4 = 4 * H
    assert Bp % 8 == 0 and In % 128 == 0 and H % 128 == 0

    # Batch split across cores (v7x megacore) when the padded batch allows it.
    B_blk = Bp // 2 if (Bp >= 16 and (Bp // 2) % 8 == 0) else Bp
    nb = Bp // B_blk

    # Time chunk sized so the per-chunk working set stays well under scoped
    # VMEM defaults (x and hseq double-buffered, gx scratch in f32).
    per_t = B_blk * (2 * In * 2 + 2 * H * 2 + 4 * H * 4)
    Tc = int(max(1, min(Tseq, chunk_budget_bytes // max(per_t, 1))))
    Tp = _round_up(Tseq, Tc)
    x_seq = _pad_axis(x_seq, 0, Tp).astype(jnp.bfloat16)
    nt = Tp // Tc

    flops = 2 * Tp * Bp * (In + H) * G4
    trans = 5 * Tp * Bp * H
    bytes_acc = (Tp * Bp * In * 2 + Tp * Bp * H * 2
                 + In * G4 * 2 + H * G4 * 2 + G4 * 4)
    cost = pl.CostEstimate(flops=flops, transcendentals=trans,
                           bytes_accessed=bytes_acc)

    return pl.pallas_call(
        functools.partial(_lstm_chunk_kernel, hidden=H),
        out_shape=jax.ShapeDtypeStruct((Tp, Bp, H), jnp.bfloat16),
        grid=(nb, nt),
        in_specs=[
            pl.BlockSpec((Tc, B_blk, In), lambda bi, ti: (ti, bi, 0)),
            pl.BlockSpec((In, G4), lambda bi, ti: (0, 0)),
            pl.BlockSpec((H, G4), lambda bi, ti: (0, 0)),
            pl.BlockSpec((1, G4), lambda bi, ti: (0, 0)),
        ],
        out_specs=pl.BlockSpec((Tc, B_blk, H), lambda bi, ti: (ti, bi, 0)),
        scratch_shapes=[
            pltpu.VMEM((B_blk, H), jnp.float32),        # h state
            pltpu.VMEM((B_blk, H), jnp.float32),        # c state
            pltpu.VMEM((Tc, B_blk, G4), jnp.float32),   # chunk gates
        ],
        compiler_params=pltpu.CompilerParams(
            dimension_semantics=("parallel", "arbitrary"),
            vmem_limit_bytes=48 * 1024 * 1024),
        cost_estimate=cost,
    )(x_seq, w_ih_t, w_hh_t, b.reshape(1, G4).astype(jnp.float32))


# ---------------------------------------------------------------------------
# Parameters (PyTorch layout) + kernel-layout preparation
# ---------------------------------------------------------------------------
def init_params(key, *, img_flat, feat_dim, embed_size, hidden_size,
                vocab_size, num_layers):
    ks = jax.random.split(key, 8 + 4 * num_layers)
    s = 0.05
    p = {
        # surrogate (frozen) backbone projection: images -> 2048-d features
        "backbone_w": s * jax.random.normal(ks[0], (feat_dim, img_flat), jnp.float32),
        "backbone_b": s * jax.random.normal(ks[1], (feat_dim,), jnp.float32),
        # replaced inception.fc : Linear(2048, embed_size)
        "enc_fc_w": s * jax.random.normal(ks[2], (embed_size, feat_dim), jnp.float32),
        "enc_fc_b": s * jax.random.normal(ks[3], (embed_size,), jnp.float32),
        # decoder embedding
        "embed": s * jax.random.normal(ks[4], (vocab_size, embed_size), jnp.float32),
        # decoder output linear
        "dec_fc_w": s * jax.random.normal(ks[5], (vocab_size, hidden_size), jnp.float32),
        "dec_fc_b": s * jax.random.normal(ks[6], (vocab_size,), jnp.float32),
        "lstm": [],
    }
    for layer in range(num_layers):
        in_dim = embed_size if layer == 0 else hidden_size
        kk = ks[8 + 4 * layer: 8 + 4 * (layer + 1)]
        p["lstm"].append({
            "w_ih": s * jax.random.normal(kk[0], (4 * hidden_size, in_dim), jnp.float32),
            "w_hh": s * jax.random.normal(kk[1], (4 * hidden_size, hidden_size), jnp.float32),
            "b_ih": s * jax.random.normal(kk[2], (4 * hidden_size,), jnp.float32),
            "b_hh": s * jax.random.normal(kk[3], (4 * hidden_size,), jnp.float32),
        })
    return p


def _pad_gate_blocks(w, hidden, hidden_pad):
    """Pad a PyTorch gate-stacked array (4*H, ...) -> (4*H_pad, ...) per gate."""
    tail = w.shape[1:]
    w4 = w.reshape(4, hidden, *tail)
    w4 = _pad_axis(w4, 1, hidden_pad)
    return w4.reshape(4 * hidden_pad, *tail)


def prepare_kernel_params(p, *, embed_size, hidden_size, vocab_size):
    """PyTorch-layout params -> lane-padded, pre-transposed, bf16 kernel params.
    Zero padding keeps the un-padded outputs numerically identical."""
    Hp = _round_up(hidden_size, 128)
    Ep = _round_up(embed_size, 128)
    Vp = _round_up(vocab_size, 128)
    feat_dim, img_flat = p["backbone_w"].shape
    Fp = _round_up(feat_dim, 128)
    Kp = _round_up(img_flat, 128)

    def lin(w, b, out_pad, in_pad):
        w = _pad_axis(_pad_axis(w, 0, out_pad), 1, in_pad)    # (out_pad, in_pad)
        return w.T.astype(jnp.bfloat16), _pad_axis(b, 0, out_pad).astype(jnp.float32)

    kp = {}
    kp["backbone_w"], kp["backbone_b"] = lin(p["backbone_w"], p["backbone_b"], Fp, Kp)
    kp["enc_fc_w"], kp["enc_fc_b"] = lin(p["enc_fc_w"], p["enc_fc_b"], Ep, Fp)
    kp["dec_fc_w"], kp["dec_fc_b"] = lin(p["dec_fc_w"], p["dec_fc_b"], Vp, Hp)
    # embedding table in bf16 (only ever feeds bf16 matmuls)
    kp["embed"] = _pad_axis(p["embed"], 1, Ep).astype(jnp.bfloat16)

    layers = []
    for layer_idx, lp in enumerate(p["lstm"]):
        in_pad = Ep if layer_idx == 0 else Hp
        w_ih = _pad_axis(_pad_gate_blocks(lp["w_ih"], hidden_size, Hp), 1, in_pad)
        w_hh = _pad_axis(_pad_gate_blocks(lp["w_hh"], hidden_size, Hp), 1, Hp)
        bias = _pad_gate_blocks(lp["b_ih"] + lp["b_hh"], hidden_size, Hp)
        layers.append({
            "w_ih_t": w_ih.T.astype(jnp.bfloat16),    # (in_pad, 4*Hp)
            "w_hh_t": w_hh.T.astype(jnp.bfloat16),    # (Hp, 4*Hp)
            "b": bias.astype(jnp.float32),            # (4*Hp,)
        })
    kp["lstm"] = layers
    return kp


# ---------------------------------------------------------------------------
# Forward pass
# ---------------------------------------------------------------------------
def cnn_to_rnn_forward(kp, images, captions, *, vocab_size):
    """images: (B, C, H, W) float32; captions: (T, B) int32.
    Returns logits of shape (T+1, B, vocab_size) in float32."""
    B = images.shape[0]
    T = captions.shape[0]
    Tseq = T + 1
    Bp = _round_up(B, 8)
    Kp = kp["backbone_w"].shape[0]

    # ---- EncoderCNN ----
    # TODO(synk): pretrained Inception-V3 conv backbone replaced by a
    # deterministic flatten + linear projection to its 2048-d feature space.
    x_flat = images.reshape(B, -1).astype(jnp.bfloat16)
    x_flat = _pad_axis(_pad_axis(x_flat, 1, Kp), 0, Bp)                  # (Bp, Kp)
    backbone_feat = pallas_linear(x_flat, kp["backbone_w"], kp["backbone_b"],
                                  out_dtype=jnp.bfloat16)                # (Bp, Fp)
    # replaced inception.fc, then ReLU (dropout = identity at inference)
    features = pallas_linear(backbone_feat, kp["enc_fc_w"], kp["enc_fc_b"],
                             relu=True, out_dtype=jnp.bfloat16)          # (Bp, Ep)

    # ---- DecoderRNN ----
    # embedding lookup (XLA gather, bf16) + dropout (identity at inference)
    emb = jnp.take(kp["embed"], captions, axis=0)                        # (T, B, Ep)
    emb = _pad_axis(emb, 1, Bp)                                          # (T, Bp, Ep)
    # torch.cat((features.unsqueeze(0), embeddings), dim=0)
    seq = jnp.concatenate([features[None, :, :], emb], axis=0)           # (Tseq, Bp, Ep)

    # multi-layer LSTM, zero initial states (fused input proj + recurrence)
    h = seq
    for layer in kp["lstm"]:
        h = pallas_lstm_layer(h, layer["w_ih_t"], layer["w_hh_t"], layer["b"])

    Tp, _, Hp = h.shape
    logits = pallas_linear(h.reshape(Tp * Bp, Hp),
                           kp["dec_fc_w"], kp["dec_fc_b"],
                           out_dtype=jnp.float32)                        # (Tp*Bp, Vp)
    logits = logits.reshape(Tp, Bp, -1)
    return logits[:Tseq, :B, :vocab_size]


# ---------------------------------------------------------------------------
if __name__ == "__main__":
    # small shapes
    B, C, Himg, Wimg = 2, 3, 16, 16
    T = 8
    embed_size, hidden_size, vocab_size, num_layers = 32, 32, 128, 2
    feat_dim = 2048   # Inception-V3 fc.in_features

    key = jax.random.PRNGKey(0)
    k_img, k_cap, k_par = jax.random.split(key, 3)

    images = jax.random.normal(k_img, (B, C, Himg, Wimg), jnp.float32)
    captions = jax.random.randint(k_cap, (T, B), 0, vocab_size, jnp.int32)

    params = init_params(
        k_par,
        img_flat=C * Himg * Wimg,
        feat_dim=feat_dim,
        embed_size=embed_size,
        hidden_size=hidden_size,
        vocab_size=vocab_size,
        num_layers=num_layers,
    )
    kparams = prepare_kernel_params(
        params,
        embed_size=embed_size,
        hidden_size=hidden_size,
        vocab_size=vocab_size,
    )

    forward = jax.jit(functools.partial(cnn_to_rnn_forward, vocab_size=vocab_size))
    out = forward(kparams, images, captions)
    out = jax.block_until_ready(out)
    assert out.shape == (T + 1, B, vocab_size), out.shape
    assert jnp.all(jnp.isfinite(out))
    print("KERNEL_OK")
</pallas_src>

<mosaic_0001>
module attributes {stable_mosaic.version = 11 : i64} {
  func.func @_lstm_chunk_kernel(%arg0: i32, %arg1: i32, %arg2: memref<9x8x128xbf16, #tpu.memory_space<vmem>>, %arg3: memref<128x512xbf16, #tpu.memory_space<vmem>>, %arg4: memref<128x512xbf16, #tpu.memory_space<vmem>>, %arg5: memref<1x512xf32, #tpu.memory_space<vmem>>, %arg6: memref<9x8x128xbf16, #tpu.memory_space<vmem>>, %arg7: memref<8x128xf32, #tpu.memory_space<vmem>>, %arg8: memref<8x128xf32, #tpu.memory_space<vmem>>, %arg9: memref<9x8x512xf32, #tpu.memory_space<vmem>>) attributes {dimension_semantics = [#tpu.dimension_semantics<parallel>, #tpu.dimension_semantics<arbitrary>], iteration_bounds = array<i64: 1, 1>, scalar_prefetch = 0 : i64, scratch_operands = 3 : i64, tpu.core_type = #tpu.core_type<tc>, window_params = [{transform_indices = @transform_0, window_bounds = array<i64: 9, 8, 128>}, {pipeline_mode = #tpu.pipeline_mode<synchronous>, transform_indices = @transform_1, window_bounds = array<i64: 128, 512>}, {pipeline_mode = #tpu.pipeline_mode<synchronous>, transform_indices = @transform_2, window_bounds = array<i64: 128, 512>}, {pipeline_mode = #tpu.pipeline_mode<synchronous>, transform_indices = @transform_3, window_bounds = array<i64: 1, 512>}, {transform_indices = @transform_4, window_bounds = array<i64: 9, 8, 128>}]} {
    %c0_i32 = arith.constant 0 : i32
    %0 = arith.cmpi eq, %arg1, %c0_i32 : i32
    %1 = arith.extui %0 : i1 to i32
    %c0_i32_0 = arith.constant 0 : i32
    %2 = arith.cmpi ne, %1, %c0_i32_0 : i32
    scf.if %2 {
      %cst_12 = arith.constant 0.000000e+00 : f32
      %13 = vector.broadcast %cst_12 : f32 to vector<8x128xf32>
      %c0_13 = arith.constant 0 : index
      %c0_14 = arith.constant 0 : index
      %14 = vector.load %arg7[%c0_13, %c0_14] : memref<8x128xf32, #tpu.memory_space<vmem>>, vector<8x128xf32>
      tpu.vector_store %arg7[%c0_13, %c0_14], %13 {strides = array<i32>} : memref<8x128xf32, #tpu.memory_space<vmem>>, vector<8x128xf32>,
      %cst_15 = arith.constant 0.000000e+00 : f32
      %15 = vector.broadcast %cst_15 : f32 to vector<8x128xf32>
      %c0_16 = arith.constant 0 : index
      %c0_17 = arith.constant 0 : index
      %16 = vector.load %arg8[%c0_16, %c0_17] : memref<8x128xf32, #tpu.memory_space<vmem>>, vector<8x128xf32>
      tpu.vector_store %arg8[%c0_16, %c0_17], %15 {strides = array<i32>} : memref<8x128xf32, #tpu.memory_space<vmem>>, vector<8x128xf32>,
    } else {
    }
    %c0 = arith.constant 0 : index
    %c0_1 = arith.constant 0 : index
    %c0_2 = arith.constant 0 : index
    %3 = vector.load %arg2[%c0, %c0_1, %c0_2] : memref<9x8x128xbf16, #tpu.memory_space<vmem>>, vector<9x8x128xbf16>
    %4 = vector.shape_cast %3 : vector<9x8x128xbf16> to vector<72x128xbf16>
    %c0_3 = arith.constant 0 : index
    %c0_4 = arith.constant 0 : index
    %5 = vector.load %arg3[%c0_3, %c0_4] : memref<128x512xbf16, #tpu.memory_space<vmem>>, vector<128x512xbf16>
    %cst = arith.constant dense<0.000000e+00> : vector<72x512xf32>
    %6 = tpu.matmul %4, %5, %cst {dimension_numbers = #tpu.dot_dimension_numbers<[1], [0], [0], [1], [0, 0, 1, 1], [], []>} : vector<72x128xbf16>, vector<128x512xbf16>, vector<72x512xf32> -> vector<72x512xf32>
    %c0_5 = arith.constant 0 : index
    %c0_6 = arith.constant 0 : index
    %7 = vector.load %arg5[%c0_5, %c0_6] : memref<1x512xf32, #tpu.memory_space<vmem>>, vector<1x512xf32>
    %8 = vector.broadcast %7 : vector<1x512xf32> to vector<72x512xf32>
    %9 = arith.addf %6, %8 : vector<72x512xf32>
    %10 = vector.shape_cast %9 : vector<72x512xf32> to vector<9x8x512xf32>
    %c0_7 = arith.constant 0 : index
    %c0_8 = arith.constant 0 : index
    %c0_9 = arith.constant 0 : index
    %11 = vector.load %arg9[%c0_7, %c0_8, %c0_9] : memref<9x8x512xf32, #tpu.memory_space<vmem>>, vector<9x8x512xf32>
    tpu.vector_store %arg9[%c0_7, %c0_8, %c0_9], %10 {strides = array<i32>} : memref<9x8x512xf32, #tpu.memory_space<vmem>>, vector<9x8x512xf32>,
    %c0_i32_10 = arith.constant 0 : i32
    %c9_i32 = arith.constant 9 : i32
    %12 = arith.addi %c0_i32_10, %c9_i32 : i32
    %c1_i32 = arith.constant 1 : i32
    scf.for %arg10 = %c0_i32_10 to %12 step %c1_i32  : i32 {
      %c1_i32_12 = arith.constant 1 : i32
      %13 = arith.muli %arg10, %c1_i32_12 : i32
      %c0_i32_13 = arith.constant 0 : i32
      %14 = arith.addi %c0_i32_13, %13 : i32
      %15 = arith.index_cast %14 : i32 to index
      %c0_14 = arith.constant 0 : index
      %c0_15 = arith.constant 0 : index
      %16 = vector.load %arg9[%15, %c0_14, %c0_15] : memref<9x8x512xf32, #tpu.memory_space<vmem>>, vector<1x8x512xf32>
      %17 = vector.shape_cast %16 : vector<1x8x512xf32> to vector<8x512xf32>
      %c0_16 = arith.constant 0 : index
      %c0_17 = arith.constant 0 : index
      %18 = vector.load %arg7[%c0_16, %c0_17] : memref<8x128xf32, #tpu.memory_space<vmem>>, vector<8x128xf32>
      %19 = arith.truncf %18 : vector<8x128xf32> to vector<8x128xbf16>
      %c0_18 = arith.constant 0 : index
      %c0_19 = arith.constant 0 : index
      %20 = vector.load %arg4[%c0_18, %c0_19] : memref<128x512xbf16, #tpu.memory_space<vmem>>, vector<128x512xbf16>
      %cst_20 = arith.constant dense<0.000000e+00> : vector<8x512xf32>
      %21 = tpu.matmul %19, %20, %cst_20 {dimension_numbers = #tpu.dot_dimension_numbers<[1], [0], [0], [1], [0, 0, 1, 1], [], []>} : vector<8x128xbf16>, vector<128x512xbf16>, vector<8x512xf32> -> vector<8x512xf32>
      %22 = arith.addf %17, %21 : vector<8x512xf32>
      %23 = vector.extract_strided_slice %22 {offsets = [0, 0], sizes = [8, 128], strides = [1, 1]} : vector<8x512xf32> to vector<8x128xf32>
      %24 = arith.negf %23 : vector<8x128xf32>
      %25 = math.exp %24 : vector<8x128xf32>
      %cst_21 = arith.constant 1.000000e+00 : f32
      %26 = vector.broadcast %cst_21 : f32 to vector<8x128xf32>
      %27 = arith.addf %26, %25 : vector<8x128xf32>
      %28 = arith.divf %26, %27 : vector<8x128xf32>
      %29 = vector.extract_strided_slice %22 {offsets = [0, 128], sizes = [8, 128], strides = [1, 1]} : vector<8x512xf32> to vector<8x128xf32>
      %30 = arith.negf %29 : vector<8x128xf32>
      %31 = math.exp %30 : vector<8x128xf32>
      %cst_22 = arith.constant 1.000000e+00 : f32
      %32 = vector.broadcast %cst_22 : f32 to vector<8x128xf32>
      %33 = arith.addf %32, %31 : vector<8x128xf32>
      %34 = arith.divf %32, %33 : vector<8x128xf32>
      %35 = vector.extract_strided_slice %22 {offsets = [0, 256], sizes = [8, 128], strides = [1, 1]} : vector<8x512xf32> to vector<8x128xf32>
      %36 = math.tanh %35 : vector<8x128xf32>
      %37 = vector.extract_strided_slice %22 {offsets = [0, 384], sizes = [8, 128], strides = [1, 1]} : vector<8x512xf32> to vector<8x128xf32>
      %38 = arith.negf %37 : vector<8x128xf32>
      %39 = math.exp %38 : vector<8x128xf32>
      %cst_23 = arith.constant 1.000000e+00 : f32
      %40 = vector.broadcast %cst_23 : f32 to vector<8x128xf32>
      %41 = arith.addf %40, %39 : vector<8x128xf32>
      %42 = arith.divf %40, %41 : vector<8x128xf32>
      %c0_24 = arith.constant 0 : index
      %c0_25 = arith.constant 0 : index
      %43 = vector.load %arg8[%c0_24, %c0_25] : memref<8x128xf32, #tpu.memory_space<vmem>>, vector<8x128xf32>
      %44 = arith.mulf %34, %43 : vector<8x128xf32>
      %45 = arith.mulf %28, %36 : vector<8x128xf32>
      %46 = arith.addf %44, %45 : vector<8x128xf32>
      %47 = math.tanh %46 : vector<8x128xf32>
      %48 = arith.mulf %42, %47 : vector<8x128xf32>
      %c0_26 = arith.constant 0 : index
      %c0_27 = arith.constant 0 : index
      %49 = vector.load %arg8[%c0_26, %c0_27] : memref<8x128xf32, #tpu.memory_space<vmem>>, vector<8x128xf32>
      tpu.vector_store %arg8[%c0_26, %c0_27], %46 {strides = array<i32>} : memref<8x128xf32, #tpu.memory_space<vmem>>, vector<8x128xf32>,
      %c0_28 = arith.constant 0 : index
      %c0_29 = arith.constant 0 : index
      %50 = vector.load %arg7[%c0_28, %c0_29] : memref<8x128xf32, #tpu.memory_space<vmem>>, vector<8x128xf32>
      tpu.vector_store %arg7[%c0_28, %c0_29], %48 {strides = array<i32>} : memref<8x128xf32, #tpu.memory_space<vmem>>, vector<8x128xf32>,
      %51 = arith.truncf %48 : vector<8x128xf32> to vector<8x128xbf16>
      %52 = arith.index_cast %14 : i32 to index
      %c0_30 = arith.constant 0 : index
      %c0_31 = arith.constant 0 : index
      %53 = vector.load %arg6[%52, %c0_30, %c0_31] : memref<9x8x128xbf16, #tpu.memory_space<vmem>>, vector<1x8x128xbf16>
      %54 = vector.shape_cast %53 : vector<1x8x128xbf16> to vector<8x128xbf16>
      %55 = vector.shape_cast %51 : vector<8x128xbf16> to vector<1x8x128xbf16>
      tpu.vector_store %arg6[%52, %c0_30, %c0_31], %55 {strides = array<i32>} : memref<9x8x128xbf16, #tpu.memory_space<vmem>>, vector<1x8x128xbf16>,
    }
    %c9_i32_11 = arith.constant 9 : i32
    return
  }
  func.func @transform_0(%arg0: i32, %arg1: i32) -> (i32, i32, i32) {
    %c0_i32 = arith.constant 0 : i32
    %c0_i32_0 = arith.constant 0 : i32
    return %arg1, %arg0, %c0_i32 : i32, i32, i32
  }
  func.func @transform_1(%arg0: i32, %arg1: i32) -> (i32, i32) {
    %c0_i32 = arith.constant 0 : i32
    %c0_i32_0 = arith.constant 0 : i32
    %c0_i32_1 = arith.constant 0 : i32
    return %c0_i32, %c0_i32_0 : i32, i32
  }
  func.func @transform_2(%arg0: i32, %arg1: i32) -> (i32, i32) {
    %c0_i32 = arith.constant 0 : i32
    %c0_i32_0 = arith.constant 0 : i32
    %c0_i32_1 = arith.constant 0 : i32
    return %c0_i32, %c0_i32_0 : i32, i32
  }
  func.func @transform_3(%arg0: i32, %arg1: i32) -> (i32, i32) {
    %c0_i32 = arith.constant 0 : i32
    %c0_i32_0 = arith.constant 0 : i32
    %c0_i32_1 = arith.constant 0 : i32
    return %c0_i32, %c0_i32_0 : i32, i32
  }
  func.func @transform_4(%arg0: i32, %arg1: i32) -> (i32, i32, i32) {
    %c0_i32 = arith.constant 0 : i32
    %c0_i32_0 = arith.constant 0 : i32
    return %arg1, %arg0, %c0_i32 : i32, i32, i32
  }
}

module attributes {stable_mosaic.version = 11 : i64} {
  func.func @_linear_tiled_kernel(%arg0: i32, %arg1: i32, %arg2: i32, %arg3: memref<8x384xbf16, #tpu.memory_space<vmem>>, %arg4: memref<384x512xbf16, #tpu.memory_space<vmem>>, %arg5: memref<1x512xf32, #tpu.memory_space<vmem>>, %arg6: memref<8x512xbf16, #tpu.memory_space<vmem>>, %arg7: memref<8x512xf32, #tpu.memory_space<vmem>>) attributes {dimension_semantics = [#tpu.dimension_semantics<parallel>, #tpu.dimension_semantics<parallel>, #tpu.dimension_semantics<arbitrary>], iteration_bounds = array<i64: 1, 4, 2>, scalar_prefetch = 0 : i64, scratch_operands = 1 : i64, tpu.core_type = #tpu.core_type<tc>, window_params = [{transform_indices = @transform_0, window_bounds = array<i64: 8, 384>}, {transform_indices = @transform_1, window_bounds = array<i64: 384, 512>}, {transform_indices = @transform_2, window_bounds = array<i64: 1, 512>}, {transform_indices = @transform_3, window_bounds = array<i64: 8, 512>}]} {
    %c0_i32 = arith.constant 0 : i32
    %0 = arith.cmpi eq, %arg2, %c0_i32 : i32
    %1 = arith.extui %0 : i1 to i32
    %c0_i32_0 = arith.constant 0 : i32
    %2 = arith.cmpi ne, %1, %c0_i32_0 : i32
    scf.if %2 {
      %cst_9 = arith.constant 0.000000e+00 : f32
      %12 = vector.broadcast %cst_9 : f32 to vector<8x512xf32>
      %c0_10 = arith.constant 0 : index
      %c0_11 = arith.constant 0 : index
      %13 = vector.load %arg7[%c0_10, %c0_11] : memref<8x512xf32, #tpu.memory_space<vmem>>, vector<8x512xf32>
      tpu.vector_store %arg7[%c0_10, %c0_11], %12 {strides = array<i32>} : memref<8x512xf32, #tpu.memory_space<vmem>>, vector<8x512xf32>,
    } else {
    }
    %c0 = arith.constant 0 : index
    %c0_1 = arith.constant 0 : index
    %3 = vector.load %arg7[%c0, %c0_1] : memref<8x512xf32, #tpu.memory_space<vmem>>, vector<8x512xf32>
    %c0_2 = arith.constant 0 : index
    %c0_3 = arith.constant 0 : index
    %4 = vector.load %arg3[%c0_2, %c0_3] : memref<8x384xbf16, #tpu.memory_space<vmem>>, vector<8x384xbf16>
    %c0_4 = arith.constant 0 : index
    %c0_5 = arith.constant 0 : index
    %5 = vector.load %arg4[%c0_4, %c0_5] : memref<384x512xbf16, #tpu.memory_space<vmem>>, vector<384x512xbf16>
    %cst = arith.constant dense<0.000000e+00> : vector<8x512xf32>
    %6 = tpu.matmul %4, %5, %cst {dimension_numbers = #tpu.dot_dimension_numbers<[1], [0], [0], [1], [0, 0, 1, 1], [], []>} : vector<8x384xbf16>, vector<384x512xbf16>, vector<8x512xf32> -> vector<8x512xf32>
    %7 = arith.addf %3, %6 : vector<8x512xf32>
    %c0_6 = arith.constant 0 : index
    %c0_7 = arith.constant 0 : index
    %8 = vector.load %arg7[%c0_6, %c0_7] : memref<8x512xf32, #tpu.memory_space<vmem>>, vector<8x512xf32>
    tpu.vector_store %arg7[%c0_6, %c0_7], %7 {strides = array<i32>} : memref<8x512xf32, #tpu.memory_space<vmem>>, vector<8x512xf32>,
    %c1_i32 = arith.constant 1 : i32
    %9 = arith.cmpi eq, %arg2, %c1_i32 : i32
    %10 = arith.extui %9 : i1 to i32
    %c0_i32_8 = arith.constant 0 : i32
    %11 = arith.cmpi ne, %10, %c0_i32_8 : i32
    scf.if %11 {
      %c0_9 = arith.constant 0 : index
      %c0_10 = arith.constant 0 : index
      %12 = vector.load %arg7[%c0_9, %c0_10] : memref<8x512xf32, #tpu.memory_space<vmem>>, vector<8x512xf32>
      %c0_11 = arith.constant 0 : index
      %c0_12 = arith.constant 0 : index
      %13 = vector.load %arg5[%c0_11, %c0_12] : memref<1x512xf32, #tpu.memory_space<vmem>>, vector<1x512xf32>
      %14 = vector.broadcast %13 : vector<1x512xf32> to vector<8x512xf32>
      %15 = arith.addf %12, %14 : vector<8x512xf32>
      %16 = arith.truncf %15 : vector<8x512xf32> to vector<8x512xbf16>
      %c0_13 = arith.constant 0 : index
      %c0_14 = arith.constant 0 : index
      %17 = vector.load %arg6[%c0_13, %c0_14] : memref<8x512xbf16, #tpu.memory_space<vmem>>, vector<8x512xbf16>
      tpu.vector_store %arg6[%c0_13, %c0_14], %16 {strides = array<i32>} : memref<8x512xbf16, #tpu.memory_space<vmem>>, vector<8x512xbf16>,
    } else {
    }
    return
  }
  func.func @transform_0(%arg0: i32, %arg1: i32, %arg2: i32) -> (i32, i32) {
    %c0_i32 = arith.constant 0 : i32
    return %arg0, %arg2 : i32, i32
  }
  func.func @transform_1(%arg0: i32, %arg1: i32, %arg2: i32) -> (i32, i32) {
    %c0_i32 = arith.constant 0 : i32
    return %arg2, %arg1 : i32, i32
  }
  func.func @transform_2(%arg0: i32, %arg1: i32, %arg2: i32) -> (i32, i32) {
    %c0_i32 = arith.constant 0 : i32
    %c0_i32_0 = arith.constant 0 : i32
    return %c0_i32, %arg1 : i32, i32
  }
  func.func @transform_3(%arg0: i32, %arg1: i32, %arg2: i32) -> (i32, i32) {
    %c0_i32 = arith.constant 0 : i32
    return %arg0, %arg1 : i32, i32
  }
}

module attributes {stable_mosaic.version = 11 : i64} {
  func.func @_linear_tiled_kernel(%arg0: i32, %arg1: i32, %arg2: i32, %arg3: memref<8x512xbf16, #tpu.memory_space<vmem>>, %arg4: memref<512x128xbf16, #tpu.memory_space<vmem>>, %arg5: memref<1x128xf32, #tpu.memory_space<vmem>>, %arg6: memref<8x128xbf16, #tpu.memory_space<vmem>>, %arg7: memref<8x128xf32, #tpu.memory_space<vmem>>) attributes {dimension_semantics = [#tpu.dimension_semantics<parallel>, #tpu.dimension_semantics<parallel>, #tpu.dimension_semantics<arbitrary>], iteration_bounds = array<i64: 1, 1, 4>, scalar_prefetch = 0 : i64, scratch_operands = 1 : i64, tpu.core_type = #tpu.core_type<tc>, window_params = [{transform_indices = @transform_0, window_bounds = array<i64: 8, 512>}, {transform_indices = @transform_1, window_bounds = array<i64: 512, 128>}, {transform_indices = @transform_2, window_bounds = array<i64: 1, 128>}, {transform_indices = @transform_3, window_bounds = array<i64: 8, 128>}]} {
    %c0_i32 = arith.constant 0 : i32
    %0 = arith.cmpi eq, %arg2, %c0_i32 : i32
    %1 = arith.extui %0 : i1 to i32
    %c0_i32_0 = arith.constant 0 : i32
    %2 = arith.cmpi ne, %1, %c0_i32_0 : i32
    scf.if %2 {
      %cst_9 = arith.constant 0.000000e+00 : f32
      %12 = vector.broadcast %cst_9 : f32 to vector<8x128xf32>
      %c0_10 = arith.constant 0 : index
      %c0_11 = arith.constant 0 : index
      %13 = vector.load %arg7[%c0_10, %c0_11] : memref<8x128xf32, #tpu.memory_space<vmem>>, vector<8x128xf32>
      tpu.vector_store %arg7[%c0_10, %c0_11], %12 {strides = array<i32>} : memref<8x128xf32, #tpu.memory_space<vmem>>, vector<8x128xf32>,
    } else {
    }
    %c0 = arith.constant 0 : index
    %c0_1 = arith.constant 0 : index
    %3 = vector.load %arg7[%c0, %c0_1] : memref<8x128xf32, #tpu.memory_space<vmem>>, vector<8x128xf32>
    %c0_2 = arith.constant 0 : index
    %c0_3 = arith.constant 0 : index
    %4 = vector.load %arg3[%c0_2, %c0_3] : memref<8x512xbf16, #tpu.memory_space<vmem>>, vector<8x512xbf16>
    %c0_4 = arith.constant 0 : index
    %c0_5 = arith.constant 0 : index
    %5 = vector.load %arg4[%c0_4, %c0_5] : memref<512x128xbf16, #tpu.memory_space<vmem>>, vector<512x128xbf16>
    %cst = arith.constant dense<0.000000e+00> : vector<8x128xf32>
    %6 = tpu.matmul %4, %5, %cst {dimension_numbers = #tpu.dot_dimension_numbers<[1], [0], [0], [1], [0, 0, 1, 1], [], []>} : vector<8x512xbf16>, vector<512x128xbf16>, vector<8x128xf32> -> vector<8x128xf32>
    %7 = arith.addf %3, %6 : vector<8x128xf32>
    %c0_6 = arith.constant 0 : index
    %c0_7 = arith.constant 0 : index
    %8 = vector.load %arg7[%c0_6, %c0_7] : memref<8x128xf32, #tpu.memory_space<vmem>>, vector<8x128xf32>
    tpu.vector_store %arg7[%c0_6, %c0_7], %7 {strides = array<i32>} : memref<8x128xf32, #tpu.memory_space<vmem>>, vector<8x128xf32>,
    %c3_i32 = arith.constant 3 : i32
    %9 = arith.cmpi eq, %arg2, %c3_i32 : i32
    %10 = arith.extui %9 : i1 to i32
    %c0_i32_8 = arith.constant 0 : i32
    %11 = arith.cmpi ne, %10, %c0_i32_8 : i32
    scf.if %11 {
      %c0_9 = arith.constant 0 : index
      %c0_10 = arith.constant 0 : index
      %12 = vector.load %arg7[%c0_9, %c0_10] : memref<8x128xf32, #tpu.memory_space<vmem>>, vector<8x128xf32>
      %c0_11 = arith.constant 0 : index
      %c0_12 = arith.constant 0 : index
      %13 = vector.load %arg5[%c0_11, %c0_12] : memref<1x128xf32, #tpu.memory_space<vmem>>, vector<1x128xf32>
      %14 = vector.broadcast %13 : vector<1x128xf32> to vector<8x128xf32>
      %15 = arith.addf %12, %14 : vector<8x128xf32>
      %cst_13 = arith.constant 0.000000e+00 : f32
      %16 = vector.broadcast %cst_13 : f32 to vector<8x128xf32>
      %17 = arith.maximumf %15, %16 : vector<8x128xf32>
      %18 = arith.truncf %17 : vector<8x128xf32> to vector<8x128xbf16>
      %c0_14 = arith.constant 0 : index
      %c0_15 = arith.constant 0 : index
      %19 = vector.load %arg6[%c0_14, %c0_15] : memref<8x128xbf16, #tpu.memory_space<vmem>>, vector<8x128xbf16>
      tpu.vector_store %arg6[%c0_14, %c0_15], %18 {strides = array<i32>} : memref<8x128xbf16, #tpu.memory_space<vmem>>, vector<8x128xbf16>,
    } else {
    }
    return
  }
  func.func @transform_0(%arg0: i32, %arg1: i32, %arg2: i32) -> (i32, i32) {
    %c0_i32 = arith.constant 0 : i32
    return %arg0, %arg2 : i32, i32
  }
  func.func @transform_1(%arg0: i32, %arg1: i32, %arg2: i32) -> (i32, i32) {
    %c0_i32 = arith.constant 0 : i32
    return %arg2, %arg1 : i32, i32
  }
  func.func @transform_2(%arg0: i32, %arg1: i32, %arg2: i32) -> (i32, i32) {
    %c0_i32 = arith.constant 0 : i32
    %c0_i32_0 = arith.constant 0 : i32
    return %c0_i32, %arg1 : i32, i32
  }
  func.func @transform_3(%arg0: i32, %arg1: i32, %arg2: i32) -> (i32, i32) {
    %c0_i32 = arith.constant 0 : i32
    return %arg0, %arg1 : i32, i32
  }
}

module attributes {stable_mosaic.version = 11 : i64} {
  func.func @_linear_single_k_kernel(%arg0: i32, %arg1: i32, %arg2: memref<72x128xbf16, #tpu.memory_space<vmem>>, %arg3: memref<128x128xbf16, #tpu.memory_space<vmem>>, %arg4: memref<1x128xf32, #tpu.memory_space<vmem>>, %arg5: memref<72x128xf32, #tpu.memory_space<vmem>>) attributes {dimension_semantics = [#tpu.dimension_semantics<parallel>, #tpu.dimension_semantics<parallel>], iteration_bounds = array<i64: 1, 1>, scalar_prefetch = 0 : i64, scratch_operands = 0 : i64, tpu.core_type = #tpu.core_type<tc>, window_params = [{transform_indices = @transform_0, window_bounds = array<i64: 72, 128>}, {transform_indices = @transform_1, window_bounds = array<i64: 128, 128>}, {transform_indices = @transform_2, window_bounds = array<i64: 1, 128>}, {transform_indices = @transform_3, window_bounds = array<i64: 72, 128>}]} {
    %c0 = arith.constant 0 : index
    %c0_0 = arith.constant 0 : index
    %0 = vector.load %arg2[%c0, %c0_0] : memref<72x128xbf16, #tpu.memory_space<vmem>>, vector<72x128xbf16>
    %c0_1 = arith.constant 0 : index
    %c0_2 = arith.constant 0 : index
    %1 = vector.load %arg3[%c0_1, %c0_2] : memref<128x128xbf16, #tpu.memory_space<vmem>>, vector<128x128xbf16>
    %cst = arith.constant dense<0.000000e+00> : vector<72x128xf32>
    %2 = tpu.matmul %0, %1, %cst {dimension_numbers = #tpu.dot_dimension_numbers<[1], [0], [0], [1], [0, 0, 1, 1], [], []>} : vector<72x128xbf16>, vector<128x128xbf16>, vector<72x128xf32> -> vector<72x128xf32>
    %c0_3 = arith.constant 0 : index
    %c0_4 = arith.constant 0 : index
    %3 = vector.load %arg4[%c0_3, %c0_4] : memref<1x128xf32, #tpu.memory_space<vmem>>, vector<1x128xf32>
    %4 = vector.broadcast %3 : vector<1x128xf32> to vector<72x128xf32>
    %5 = arith.addf %2, %4 : vector<72x128xf32>
    %c0_5 = arith.constant 0 : index
    %c0_6 = arith.constant 0 : index
    %6 = vector.load %arg5[%c0_5, %c0_6] : memref<72x128xf32, #tpu.memory_space<vmem>>, vector<72x128xf32>
    tpu.vector_store %arg5[%c0_5, %c0_6], %5 {strides = array<i32>} : memref<72x128xf32, #tpu.memory_space<vmem>>, vector<72x128xf32>,
    return
  }
  func.func @transform_0(%arg0: i32, %arg1: i32) -> (i32, i32) {
    %c0_i32 = arith.constant 0 : i32
    %c0_i32_0 = arith.constant 0 : i32
    return %arg0, %c0_i32 : i32, i32
  }
  func.func @transform_1(%arg0: i32, %arg1: i32) -> (i32, i32) {
    %c0_i32 = arith.constant 0 : i32
    %c0_i32_0 = arith.constant 0 : i32
    return %c0_i32, %arg1 : i32, i32
  }
  func.func @transform_2(%arg0: i32, %arg1: i32) -> (i32, i32) {
    %c0_i32 = arith.constant 0 : i32
    %c0_i32_0 = arith.constant 0 : i32
    return %c0_i32, %arg1 : i32, i32
  }
  func.func @transform_3(%arg0: i32, %arg1: i32) -> (i32, i32) {
    %c0_i32 = arith.constant 0 : i32
    return %arg0, %arg1 : i32, i32
  }
}

</mosaic_0001>

<llo_original>
// kernel: cnn_to_rnn_forward.9
$region0: #{cnn_to_rnn_forward.9}
  #allocation0 [shape = 'u32[]', space=smem, size = 0x4, offset = 0x4, fixed_abs, tag = 'smem constant byte address 0x4 - core index']
  #allocation1 [shape = 'u32[144,128]{1,0:T(1,128)}', space=vmem, size = 0x12000, scoped, tag = 'internal scratch']
  %s0 = inlined_call_operand.vmem [shape: bf16[72,128], index: 0, kind: input, shape index: {}]
  %s1 = inlined_call_operand.vmem [shape: bf16[128,128], index: 1, kind: input, shape index: {}]
  %s2 = inlined_call_operand.vmem [shape: f32[1,128], index: 2, kind: input, shape index: {}]
  %s3 = inlined_call_operand.vmem [shape: f32[72,128], index: 3, kind: output, shape index: {}]
  %s4 = sld [smem:[#allocation0]]
  $region22: #{cnn_to_rnn_forward.9} parent=0
    _
  %s6 = ssub.s32 1, %s4
  %s7 = scalar_select 0, %s6, %s4
  // Predicated region
  $region2: #{cnn_to_rnn_forward.9} parent=0 // pred_check
    _
  $region3: #{cnn_to_rnn_forward.9} parent=0 // pred_check_branch
    %9 = sbr.rel (0) target = $region5
  $region4: #{cnn_to_rnn_forward.9} parent=0 // pred_region
    _
  $region5: #{cnn_to_rnn_forward.9} parent=0 // pred_fallthru
    _
  // Predicated region
  $region6: #{cnn_to_rnn_forward.9} parent=0 // pred_check
    _
  $region7: #{cnn_to_rnn_forward.9} parent=0 // pred_check_branch
    %11 = sbr.rel (0) target = $region9
  $region8: #{cnn_to_rnn_forward.9} parent=0 // pred_region
    _
  $region9: #{cnn_to_rnn_forward.9} parent=0 // pred_fallthru
    _
  // Predicated region
  $region10: #{cnn_to_rnn_forward.9} parent=0 // pred_check
    _
  $region11: #{cnn_to_rnn_forward.9} parent=0 // pred_check_branch
    %13 = sbr.rel (0) target = $region13
  $region12: #{cnn_to_rnn_forward.9} parent=0 // pred_region
    _
  $region13: #{cnn_to_rnn_forward.9} parent=0 // pred_fallthru
    _
  %v15 = vld [vmem:[%s0] sm:$0xf]
  %v16 = vld [vmem:[%s0 + $0x4] sm:$0xf]
  %v17 = vld [vmem:[%s0 + $0x8] sm:$0xf]
  %v18 = vld [vmem:[%s0 + $0xc] sm:$0xf]
  %v19 = vld [vmem:[%s0 + $0x10] sm:$0xf]
  %v20 = vld [vmem:[%s0 + $0x14] sm:$0xf]
  %v21 = vld [vmem:[%s0 + $0x18] sm:$0xf]
  %v22 = vld [vmem:[%s0 + $0x1c] sm:$0xf]
  %v23 = vld [vmem:[%s0 + $0x20] sm:$0xf]
  %v24 = vld [vmem:[%s1] sm:$0xf]
  %v25 = vld [vmem:[%s1 + $0x4] sm:$0xf]
  %v26 = vld [vmem:[%s1 + $0x8] sm:$0xf]
  %v27 = vld [vmem:[%s1 + $0xc] sm:$0xf]
  %v28 = vld [vmem:[%s1 + $0x10] sm:$0xf]
  %v29 = vld [vmem:[%s1 + $0x14] sm:$0xf]
  %v30 = vld [vmem:[%s1 + $0x18] sm:$0xf]
  %v31 = vld [vmem:[%s1 + $0x1c] sm:$0xf]
  %v32 = vld [vmem:[%s1 + $0x20] sm:$0xf]
  %v33 = vld [vmem:[%s1 + $0x24] sm:$0xf]
  %v34 = vld [vmem:[%s1 + $0x28] sm:$0xf]
  %v35 = vld [vmem:[%s1 + $0x2c] sm:$0xf]
  %v36 = vld [vmem:[%s1 + $0x30] sm:$0xf]
  %v37 = vld [vmem:[%s1 + $0x34] sm:$0xf]
  %v38 = vld [vmem:[%s1 + $0x38] sm:$0xf]
  %v39 = vld [vmem:[%s1 + $0x3c] sm:$0xf]
  %v40 = vld [vmem:[%s2] sm:$0x1]
  %v42 = vlaneseq
  %v43 = vshrl.u32 %v42, 7
  %v44 = vsub.s32 0, %v43
  %v45 = vrot.slane %v40, %v44
  %v56 = vunpack.c.l.b16 %v15
  %v57 = vunpack.c.l.b16 %v16
  %v58 = vunpack.c.l.b16 %v17
  %v59 = vunpack.c.l.b16 %v18
  %v60 = vunpack.c.l.b16 %v19
  %v61 = vunpack.c.l.b16 %v20
  %v62 = vunpack.c.l.b16 %v21
  %v63 = vunpack.c.l.b16 %v22
  %v64 = vunpack.c.l.b16 %v23
  %v65 = vpack.c.b16 %v57, %v56
  %v66 = vpack.c.b16 %v59, %v58
  %v67 = vpack.c.b16 %v61, %v60
  %v68 = vpack.c.b16 %v63, %v62
  %v69 = vpack.c.b16 %v64, %v64
  %v91 = vunpack.c.l.b16 %v24
  %v92 = vunpack.c.l.b16 %v25
  %v93 = vunpack.c.l.b16 %v26
  %v94 = vunpack.c.l.b16 %v27
  %v95 = vunpack.c.l.b16 %v28
  %v96 = vunpack.c.l.b16 %v29
  %v97 = vunpack.c.l.b16 %v30
  %v98 = vunpack.c.l.b16 %v31
  %v99 = vunpack.c.l.b16 %v32
  %v100 = vunpack.c.l.b16 %v33
  %v101 = vunpack.c.l.b16 %v34
  %v102 = vunpack.c.l.b16 %v35
  %v103 = vunpack.c.l.b16 %v36
  %v104 = vunpack.c.l.b16 %v37
  %v105 = vunpack.c.l.b16 %v38
  %v106 = vunpack.c.l.b16 %v39
  %v107 = vpack.c.b16 %v92, %v91
  %v108 = vpack.c.b16 %v94, %v93
  %v109 = vpack.c.b16 %v96, %v95
  %v110 = vpack.c.b16 %v98, %v97
  %v111 = vpack.c.b16 %v100, %v99
  %v112 = vpack.c.b16 %v102, %v101
  %v113 = vpack.c.b16 %v104, %v103
  %v114 = vpack.c.b16 %v106, %v105
  %123 = vmatprep.subr.bf16.mxu0 0
  %124 = vmatpush1.bf16.msra.mxu0 %v107
  %125 = vmatprep.subr.bf16.mxu0 0
  %126 = vmatpush1.bf16.msra.mxu0 %v108
  %127 = vmatprep.subr.bf16.mxu0 0
  %128 = vmatpush1.bf16.msra.mxu0 %v109
  %129 = vmatprep.subr.bf16.mxu0 0
  %130 = vmatpush1.bf16.msra.mxu0 %v110
  %131 = vmatprep.subr.bf16.mxu0 0
  %132 = vmatpush1.bf16.msra.mxu0 %v111
  %133 = vmatprep.subr.bf16.mxu0 0
  %134 = vmatpush1.bf16.msra.mxu0 %v112
  %135 = vmatprep.subr.bf16.mxu0 0
  %136 = vmatpush1.bf16.msra.mxu0 %v113
  %137 = vmatprep.subr.bf16.mxu0 0
  %138 = vmatpush1.bf16.msra.mxu0 %v114
  %139 = vmatprep.subr.bf16.mxu0 0
  %140 = vmatpush1.bf16.msra.mxu0 0
  %141 = vmatprep.subr.bf16.mxu0 0
  %142 = vmatpush1.bf16.msra.mxu0 0
  %143 = vmatprep.subr.bf16.mxu0 0
  %144 = vmatpush1.bf16.msra.mxu0 0
  %145 = vmatprep.subr.bf16.mxu0 0
  %146 = vmatpush1.bf16.msra.mxu0 0
  %147 = vmatprep.subr.bf16.mxu0 0
  %148 = vmatpush1.bf16.msra.mxu0 0
  %149 = vmatprep.subr.bf16.mxu0 0
  %150 = vmatpush1.bf16.msra.mxu0 0
  %151 = vmatprep.subr.bf16.mxu0 0
  %152 = vmatpush1.bf16.msra.mxu0 0
  %153 = vmatprep.subr.bf16.mxu0 0
  %154 = vmatpush1.bf16.msra.mxu0 0
  %155 = vmatprep.mubr.bf16.mxu0 0
  %156 = vmatmul.mubr.bf16.gmra.mrb[0].mxu0 %v65
  %v157 = vpop.f32.mrb[0].mxu0
  %v158 = vadd.f32 %v45, %v157
  %v159 = vpop.f32.mrb[0].mxu0
  %v160 = vpop.f32.mrb[0].mxu0
  %v161 = vadd.f32 %v45, %v160
  %v162 = vpop.f32.mrb[0].mxu0
  %163 = vmatprep.mubr.bf16.mxu0 0
  %164 = vmatmul.mubr.bf16.gmra.mrb[0].mxu0 %v66
  %v165 = vpop.f32.mrb[0].mxu0
  %v166 = vadd.f32 %v45, %v165
  %v167 = vpop.f32.mrb[0].mxu0
  %v168 = vpop.f32.mrb[0].mxu0
  %v169 = vadd.f32 %v45, %v168
  %v170 = vpop.f32.mrb[0].mxu0
  %171 = vmatprep.mubr.bf16.mxu0 0
  %172 = vmatmul.mubr.bf16.gmra.mrb[0].mxu0 %v67
  %v173 = vpop.f32.mrb[0].mxu0
  %v174 = vadd.f32 %v45, %v173
  %v175 = vpop.f32.mrb[0].mxu0
  %v176 = vpop.f32.mrb[0].mxu0
  %v177 = vadd.f32 %v45, %v176
  %v178 = vpop.f32.mrb[0].mxu0
  %179 = vmatprep.mubr.bf16.mxu0 0
  %180 = vmatmul.mubr.bf16.gmra.mrb[0].mxu0 %v68
  %v181 = vpop.f32.mrb[0].mxu0
  %v182 = vadd.f32 %v45, %v181
  %v183 = vpop.f32.mrb[0].mxu0
  %v184 = vpop.f32.mrb[0].mxu0
  %v185 = vadd.f32 %v45, %v184
  %v186 = vpop.f32.mrb[0].mxu0
  %187 = vmatprep.mubr.bf16.mxu0 0
  %188 = vmatmul.mubr.bf16.gmra.mrb[0].mxu0 %v69
  %v189 = vpop.f32.mrb[0].mxu0
  %v190 = vadd.f32 %v45, %v189
  %v191 = vpop.f32.mrb[0].mxu0
  %v192 = vpop.f32.mrb[0].mxu0
  %v193 = vpop.f32.mrb[0].mxu0
  %194 = vdwg.mxu0
  %195 = vst [vmem:[%s3] sm:$0xff] %v158
  %196 = vst [vmem:[%s3 + $0x8] sm:$0xff] %v161
  %197 = vst [vmem:[%s3 + $0x10] sm:$0xff] %v166
  %198 = vst [vmem:[%s3 + $0x18] sm:$0xff] %v169
  %199 = vst [vmem:[%s3 + $0x20] sm:$0xff] %v174
  %200 = vst [vmem:[%s3 + $0x28] sm:$0xff] %v177
  %201 = vst [vmem:[%s3 + $0x30] sm:$0xff] %v182
  %202 = vst [vmem:[%s3 + $0x38] sm:$0xff] %v185
  %203 = vst [vmem:[%s3 + $0x40] sm:$0xff] %v190
  // Predicated region
  $region14: #{cnn_to_rnn_forward.9} parent=0 // pred_check
    _
  $region15: #{cnn_to_rnn_forward.9} parent=0 // pred_check_branch
    %205 = sbr.rel (0) target = $region17
  $region16: #{cnn_to_rnn_forward.9} parent=0 // pred_region
    _
  $region17: #{cnn_to_rnn_forward.9} parent=0 // pred_fallthru
    _
  // Predicated region
  $region18: #{cnn_to_rnn_forward.9} parent=0 // pred_check
    _
  $region19: #{cnn_to_rnn_forward.9} parent=0 // pred_check_branch
    %207 = sbr.rel (0) target = $region21
  $region20: #{cnn_to_rnn_forward.9} parent=0 // pred_region
    _
  $region21: #{cnn_to_rnn_forward.9} parent=0 // pred_fallthru
    _

// kernel: cnn_to_rnn_forward.6
$region0: #{cnn_to_rnn_forward.6}
  #allocation0 [shape = 'u32[]', space=smem, size = 0x4, offset = 0x4, fixed_abs, tag = 'smem constant byte address 0x4 - core index']
  #allocation1 [shape = 'u32[144,128]{1,0:T(1,128)}', space=vmem, size = 0x12000, scoped, tag = 'internal scratch']
  #allocation2 [shape = 'f32[8,128]{1,0:T(8,128)}', space=vmem, size = 0x1000, scoped, tag = 'scratch operand']
  %s0 = inlined_call_operand.vmem [shape: bf16[8,2048], index: 0, kind: input, shape index: {}]
  %s1 = inlined_call_operand.vmem [shape: bf16[2048,128], index: 1, kind: input, shape index: {}]
  %s2 = inlined_call_operand.vmem [shape: f32[1,128], index: 2, kind: input, shape index: {}]
  %s3 = inlined_call_operand.vmem [shape: bf16[8,128], index: 3, kind: output, shape index: {}]
  %s4 = sld [smem:[#allocation0]]
  $region53: #{cnn_to_rnn_forward.6} parent=0
    _
  %s6 = ssub.s32 1, %s4
  %s7 = scalar_select 0, %s6, %s4
  loop: start=0, step=1, limit=6
  $region2: #{cnn_to_rnn_forward.6} parent=0 // loop_pre_header
    _
  $region3: #{cnn_to_rnn_forward.6} parent=0 // loop_header
    %s9 = sphi 0, %s13
    %p10 = scmp.ge.s32.totalorder %s9, 6
    %s16 = sphi 0, %s35
    %s17 = sphi 0, %s31
    %s18 = sphi 0, %s27
    %s19 = sphi 0, %s16
    %s20 = sphi 0, %s17
    %s21 = sphi 0, %s18
    %s22 = sphi 0, %s19
    %s23 = sphi 0, %s20
    %s24 = sphi 0, %s21
    %s40 = sphi 0, %s42
    %s43 = sphi 0, %s40
    %s44 = sphi 0, %s43
    %s60 = sphi 0, %s44
    %s68 = sphi 0, %s70
    %s71 = sphi 0, %s68
    %s72 = sphi 0, %s71
    %s88 = sphi 0, %s72
    %s94 = sphi 0, %s96
    %s97 = sphi 0, %s94
    %s98 = sphi 0, %s97
    %s114 = sphi 0, %s98
    %s122 = sphi 0, %s124
    %s125 = sphi 0, %s122
    %s126 = sphi 0, %s125
    %s142 = sphi 0, %s126
  $region4: #{cnn_to_rnn_forward.6} parent=0 // loop_header_branch
    %12 = sbr.rel (%p10) target = $region8
  $region5: #{cnn_to_rnn_forward.6} parent=0 // loop_body
    %s14 = ssub.s32 %s9, 1
    %s15 = ssub.s32 %s9, 2
    %s25 = sadd.s32 1, %s18
    %p26 = scmp.ge.s32.totalorder %s25, 4
    %s27 = scalar_select %p26, 0, %s25
    %s28 = sadd.s32 1, %s17
    %s29 = scalar_select %p26, %s28, %s17
    %p30 = scmp.ge.s32.totalorder %s29, 1
    %s31 = scalar_select %p30, 0, %s29
    %s32 = sadd.s32 1, %s16
    %s33 = scalar_select %p30, %s32, %s16
    %p34 = scmp.ge.s32.totalorder %s33, 1
    %s35 = scalar_select %p34, 0, %s33
    %s36 = ssub.s32 %s16, %s35
    %s37 = ssub.s32 %s18, %s27
    %s38 = sor.u32 %s36, %s37
    %p39 = scmp.eq.s32.totalorder %s38, 0
    %s41 = sadd.s32 %s40, 1
    %s42 = scalar_select %p39, %s40, %s41
    %p45 = pneg %p39
    %p46 = scmp.eq.s32.totalorder %s9, 3
    %p47 = por %p45, %p46
    %p48 = scmp.ne.s32.totalorder %s40, %s43
    %p49 = scmp.eq.s32.totalorder %s9, 0
    %p50 = por %p48, %p49
    %p51 = scmp.ne.s32.totalorder %s40, %s43
    %p52 = scmp.eq.s32.totalorder %s14, 3
    %p53 = por %p51, %p52
    %p54 = scmp.ne.s32.totalorder %s43, %s44
    %p55 = scmp.eq.s32.totalorder %s14, 0
    %p56 = por %p54, %p55
    %p57 = scmp.ne.s32.totalorder %s43, %s44
    %p58 = scmp.eq.s32.totalorder %s15, 3
    %p59 = por %p57, %p58
    %p61 = scmp.ne.s32.totalorder %s44, %s60
    %p62 = scmp.eq.s32.totalorder %s15, 0
    %p63 = por %p61, %p62
    %s64 = ssub.s32 %s18, %s27
    %s65 = ssub.s32 %s17, %s31
    %s66 = sor.u32 %s64, %s65
    %p67 = scmp.eq.s32.totalorder %s66, 0
    %s69 = sadd.s32 %s68, 1
    %s70 = scalar_select %p67, %s68, %s69
    %p73 = pneg %p67
    %p74 = scmp.eq.s32.totalorder %s9, 3
    %p75 = por %p73, %p74
    %p76 = scmp.ne.s32.totalorder %s68, %s71
    %p77 = scmp.eq.s32.totalorder %s9, 0
    %p78 = por %p76, %p77
    %p79 = scmp.ne.s32.totalorder %s68, %s71
    %p80 = scmp.eq.s32.totalorder %s14, 3
    %p81 = por %p79, %p80
    %p82 = scmp.ne.s32.totalorder %s71, %s72
    %p83 = scmp.eq.s32.totalorder %s14, 0
    %p84 = por %p82, %p83
    %p85 = scmp.ne.s32.totalorder %s71, %s72
    %p86 = scmp.eq.s32.totalorder %s15, 3
    %p87 = por %p85, %p86
    %p89 = scmp.ne.s32.totalorder %s72, %s88
    %p90 = scmp.eq.s32.totalorder %s15, 0
    %p91 = por %p89, %p90
    %s92 = ssub.s32 %s17, %s31
    %p93 = scmp.eq.s32.totalorder %s92, 0
    %s95 = sadd.s32 %s94, 1
    %s96 = scalar_select %p93, %s94, %s95
    %p99 = pneg %p93
    %p100 = scmp.eq.s32.totalorder %s9, 3
    %p101 = por %p99, %p100
    %p102 = scmp.ne.s32.totalorder %s94, %s97
    %p103 = scmp.eq.s32.totalorder %s9, 0
    %p104 = por %p102, %p103
    %p105 = scmp.ne.s32.totalorder %s94, %s97
    %p106 = scmp.eq.s32.totalorder %s14, 3
    %p107 = por %p105, %p106
    %p108 = scmp.ne.s32.totalorder %s97, %s98
    %p109 = scmp.eq.s32.totalorder %s14, 0
    %p110 = por %p108, %p109
    %p111 = scmp.ne.s32.totalorder %s97, %s98
    %p112 = scmp.eq.s32.totalorder %s15, 3
    %p113 = por %p111, %p112
    %p115 = scmp.ne.s32.totalorder %s98, %s114
    %p116 = scmp.eq.s32.totalorder %s15, 0
    %p117 = por %p115, %p116
    %s118 = ssub.s32 %s16, %s35
    %s119 = ssub.s32 %s17, %s31
    %s120 = sor.u32 %s118, %s119
    %p121 = scmp.eq.s32.totalorder %s120, 0
    %s123 = sadd.s32 %s122, 1
    %s124 = scalar_select %p121, %s122, %s123
    %p127 = pneg %p121
    %p128 = scmp.eq.s32.totalorder %s9, 3
    %p129 = por %p127, %p128
    %p130 = scmp.ne.s32.totalorder %s122, %s125
    %p131 = scmp.eq.s32.totalorder %s9, 0
    %p132 = por %p130, %p131
    %p133 = scmp.ne.s32.totalorder %s122, %s125
    %p134 = scmp.eq.s32.totalorder %s14, 3
    %p135 = por %p133, %p134
    %p136 = scmp.ne.s32.totalorder %s125, %s126
    %p137 = scmp.eq.s32.totalorder %s14, 0
    %p138 = por %p136, %p137
    %p139 = scmp.ne.s32.totalorder %s125, %s126
    %p140 = scmp.eq.s32.totalorder %s15, 3
    %p141 = por %p139, %p140
    %p143 = scmp.ne.s32.totalorder %s126, %s142
    %p144 = scmp.eq.s32.totalorder %s15, 0
    %p145 = por %p143, %p144
    %p146 = scmp.le.s32.totalorder 1, %s9
    %p147 = scmp.lt.s32.totalorder %s9, 5
    %p148 = pnand %p146, %p147
    %p149 = pneg %p148
    // Predicated region
    $region9: #{cnn_to_rnn_forward.6} parent=5 // pred_check
      _
    $region10: #{cnn_to_rnn_forward.6} parent=5 // pred_check_branch
      %151 = sbr.rel (%p148) target = $region12
    $region11: #{cnn_to_rnn_forward.6} parent=5 // pred_region
      %s152 = ssub.s32 %s9, 1
      // Predicated region
      $region13: #{cnn_to_rnn_forward.6} parent=11 // pred_check
        %p153 = pneg %p110
      $region14: #{cnn_to_rnn_forward.6} parent=11 // pred_check_branch
        %155 = sbr.rel (%p153) target = $region16
      $region15: #{cnn_to_rnn_forward.6} parent=11 // pred_region
        %p156 = scmp.lt.s32.totalorder %s20, 0
        %s157 = scalar_select %p156, %s20, 0
        %s158 = scalar_lea.vmem %s2, %s157
      $region16: #{cnn_to_rnn_forward.6} parent=11 // pred_fallthru
        _
    $region12: #{cnn_to_rnn_forward.6} parent=5 // pred_fallthru
      _
    %p159 = scmp.lt.s32.totalorder %s9, 4
    // Predicated region
    $region17: #{cnn_to_rnn_forward.6} parent=5 // pred_check
      %p160 = pneg %p159
    $region18: #{cnn_to_rnn_forward.6} parent=5 // pred_check_branch
      %162 = sbr.rel (%p160) target = $region20
    $region19: #{cnn_to_rnn_forward.6} parent=5 // pred_region
      // Predicated region
      $region21: #{cnn_to_rnn_forward.6} parent=19 // pred_check
        %p163 = pneg %p50
      $region22: #{cnn_to_rnn_forward.6} parent=19 // pred_check_branch
        %165 = sbr.rel (%p163) target = $region24
      $region23: #{cnn_to_rnn_forward.6} parent=19 // pred_region
        %s166 = smul.u32 4, %s18
        %p167 = scmp.lt.s32.totalorder %s16, 0
        %s168 = scalar_select %p167, %s16, 0
        %p169 = scmp.lt.s32.totalorder %s166, 15
        %s170 = scalar_select %p169, %s166, 15
        %s171 = smul.addr %s168, 16
        %s172 = sadd.s32 %s170, %s171
        %s173 = smul.addr %s172, 4
        %s174 = scalar_lea.vmem %s0, %s173
        %s175 = smul.u32 4, %s18
      $region24: #{cnn_to_rnn_forward.6} parent=19 // pred_fallthru
        _
      // Predicated region
      $region25: #{cnn_to_rnn_forward.6} parent=19 // pred_check
        %p176 = pneg %p78
      $region26: #{cnn_to_rnn_forward.6} parent=19 // pred_check_branch
        %178 = sbr.rel (%p176) target = $region28
      $region27: #{cnn_to_rnn_forward.6} parent=19 // pred_region
        %s179 = smul.u32 64, %s18
        %p180 = scmp.lt.s32.totalorder %s179, 255
        %s181 = scalar_select %p180, %s179, 255
        %p182 = scmp.lt.s32.totalorder %s17, 0
        %s183 = scalar_select %p182, %s17, 0
        %s184 = sadd.s32 %s183, %s181
        %s185 = smul.addr %s184, 4
        %s186 = scalar_lea.vmem %s1, %s185
        %s187 = smul.u32 64, %s18
      $region28: #{cnn_to_rnn_forward.6} parent=19 // pred_fallthru
        _
    $region20: #{cnn_to_rnn_forward.6} parent=5 // pred_fallthru
      _
    %p188 = scmp.le.s32.totalorder 1, %s9
    %p189 = scmp.lt.s32.totalorder %s9, 5
    %p190 = pnand %p188, %p189
    %p191 = pneg %p190
    // Predicated region
    $region29: #{cnn_to_rnn_forward.6} parent=5 // pred_check
      _
    $region30: #{cnn_to_rnn_forward.6} parent=5 // pred_check_branch
      %193 = sbr.rel (%p190) target = $region32
    $region31: #{cnn_to_rnn_forward.6} parent=5 // pred_region
      %s194 = ssub.s32 %s9, 1
      %s195 = smul.u32 4, %s21
      %p196 = scmp.lt.s32.totalorder %s19, 0
      %s197 = scalar_select %p196, %s19, 0
      %p198 = scmp.lt.s32.totalorder %s195, 15
      %s199 = scalar_select %p198, %s195, 15
      %s200 = smul.addr %s197, 16
      %s201 = sadd.s32 %s199, %s200
      %s202 = smul.addr %s201, 4
      %s203 = scalar_lea.vmem %s0, %s202
      %p204 = pneg %p56
      %p205 = pneg %p53
      %s206 = smul.u32 64, %s21
      %p207 = scmp.lt.s32.totalorder %s206, 255
      %s208 = scalar_select %p207, %s206, 255
      %p209 = scmp.lt.s32.totalorder %s20, 0
      %s210 = scalar_select %p209, %s20, 0
      %s211 = sadd.s32 %s210, %s208
      %s212 = smul.addr %s211, 4
      %s213 = scalar_lea.vmem %s1, %s212
      %p214 = pneg %p84
      %p215 = pneg %p81
      %p216 = scmp.lt.s32.totalorder %s20, 0
      %s217 = scalar_select %p216, %s20, 0
      %s218 = scalar_lea.vmem %s2, %s217
      %p219 = pneg %p110
      %p220 = pneg %p107
      %p221 = pneg %p138
      %p222 = pneg %p135
      %p223 = scmp.lt.s32.totalorder %s19, 0
      %s224 = scalar_select %p223, %s19, 0
      %p225 = scmp.lt.s32.totalorder %s20, 0
      %s226 = scalar_select %p225, %s20, 0
      %s227 = sadd.s32 %s226, %s224
      %s228 = smul.addr %s227, 4
      %s229 = scalar_lea.vmem %s3, %s228
      %s230 = smul.u32 4, %s21
      %p231 = scmp.lt.s32.totalorder %s19, 0
      %s232 = scalar_select %p231, %s19, 0
      %p233 = scmp.lt.s32.totalorder %s230, 15
      %s234 = scalar_select %p233, %s230, 15
      %s235 = smul.addr %s232, 16
      %s236 = sadd.s32 %s234, %s235
      %s237 = smul.addr %s236, 4
      %s238 = scalar_lea.vmem %s0, %s237
      %s239 = smul.u32 4, %s21
      %s240 = smul.u32 64, %s21
      %p241 = scmp.lt.s32.totalorder %s240, 255
      %s242 = scalar_select %p241, %s240, 255
      %p243 = scmp.lt.s32.totalorder %s20, 0
      %s244 = scalar_select %p243, %s20, 0
      %s245 = sadd.s32 %s244, %s242
      %s246 = smul.addr %s245, 4
      %s247 = scalar_lea.vmem %s1, %s246
      %s248 = smul.u32 64, %s21
      %p249 = scmp.lt.s32.totalorder %s20, 0
      %s250 = scalar_select %p249, %s20, 0
      %s251 = scalar_lea.vmem %s2, %s250
      %p252 = scmp.lt.s32.totalorder %s19, 0
      %s253 = scalar_select %p252, %s19, 0
      %p254 = scmp.lt.s32.totalorder %s20, 0
      %s255 = scalar_select %p254, %s20, 0
      %s256 = sadd.s32 %s255, %s253
      %s257 = smul.addr %s256, 4
      %s258 = scalar_lea.vmem %s3, %s257
      %p260 = scmp.eq.s32.totalorder %s21, 0
      // Predicated region
      $region33: #{cnn_to_rnn_forward.6} parent=31 // pred_check
        %p261 = pneg %p260
      $region34: #{cnn_to_rnn_forward.6} parent=31 // pred_check_branch
        %263 = sbr.rel (%p261) target = $region36
      $region35: #{cnn_to_rnn_forward.6} parent=31 // pred_region
        %264 = vst [vmem:[#allocation2] sm:$0xff] 0.0
      $region36: #{cnn_to_rnn_forward.6} parent=31 // pred_fallthru
        _
      %v265 = vld [vmem:[#allocation2] sm:$0xff]
      %v266 = vld [vmem:[%s238] sm:$0xff]
      %v267 = vld [vmem:[%s238 + $0x8] sm:$0xff]
      %v268 = vld [vmem:[%s247] sm:$0xf]
      %v269 = vld [vmem:[%s247 + $0x4] sm:$0xf]
      %v270 = vld [vmem:[%s247 + $0x8] sm:$0xf]
      %v271 = vld [vmem:[%s247 + $0xc] sm:$0xf]
      %v272 = vld [vmem:[%s247 + $0x10] sm:$0xf]
      %v273 = vld [vmem:[%s247 + $0x14] sm:$0xf]
      %v274 = vld [vmem:[%s247 + $0x18] sm:$0xf]
      %v275 = vld [vmem:[%s247 + $0x1c] sm:$0xf]
      %v276 = vld [vmem:[%s247 + $0x20] sm:$0xf]
      %v277 = vld [vmem:[%s247 + $0x24] sm:$0xf]
      %v278 = vld [vmem:[%s247 + $0x28] sm:$0xf]
      %v279 = vld [vmem:[%s247 + $0x2c] sm:$0xf]
      %v280 = vld [vmem:[%s247 + $0x30] sm:$0xf]
      %v281 = vld [vmem:[%s247 + $0x34] sm:$0xf]
      %v282 = vld [vmem:[%s247 + $0x38] sm:$0xf]
      %v283 = vld [vmem:[%s247 + $0x3c] sm:$0xf]
      %v284 = vld [vmem:[%s247 + $0x40] sm:$0xf]
      %v285 = vld [vmem:[%s247 + $0x44] sm:$0xf]
      %v286 = vld [vmem:[%s247 + $0x48] sm:$0xf]
      %v287 = vld [vmem:[%s247 + $0x4c] sm:$0xf]
      %v288 = vld [vmem:[%s247 + $0x50] sm:$0xf]
      %v289 = vld [vmem:[%s247 + $0x54] sm:$0xf]
      %v290 = vld [vmem:[%s247 + $0x58] sm:$0xf]
      %v291 = vld [vmem:[%s247 + $0x5c] sm:$0xf]
      %v292 = vld [vmem:[%s247 + $0x60] sm:$0xf]
      %v293 = vld [vmem:[%s247 + $0x64] sm:$0xf]
      %v294 = vld [vmem:[%s247 + $0x68] sm:$0xf]
      %v295 = vld [vmem:[%s247 + $0x6c] sm:$0xf]
      %v296 = vld [vmem:[%s247 + $0x70] sm:$0xf]
      %v297 = vld [vmem:[%s247 + $0x74] sm:$0xf]
      %v298 = vld [vmem:[%s247 + $0x78] sm:$0xf]
      %v299 = vld [vmem:[%s247 + $0x7c] sm:$0xf]
      %v300 = vld [vmem:[%s247 + $0x80] sm:$0xf]
      %v301 = vld [vmem:[%s247 + $0x84] sm:$0xf]
      %v302 = vld [vmem:[%s247 + $0x88] sm:$0xf]
      %v303 = vld [vmem:[%s247 + $0x8c] sm:$0xf]
      %v304 = vld [vmem:[%s247 + $0x90] sm:$0xf]
      %v305 = vld [vmem:[%s247 + $0x94] sm:$0xf]
      %v306 = vld [vmem:[%s247 + $0x98] sm:$0xf]
      %v307 = vld [vmem:[%s247 + $0x9c] sm:$0xf]
      %v308 = vld [vmem:[%s247 + $0xa0] sm:$0xf]
      %v309 = vld [vmem:[%s247 + $0xa4] sm:$0xf]
      %v310 = vld [vmem:[%s247 + $0xa8] sm:$0xf]
      %v311 = vld [vmem:[%s247 + $0xac] sm:$0xf]
      %v312 = vld [vmem:[%s247 + $0xb0] sm:$0xf]
      %v313 = vld [vmem:[%s247 + $0xb4] sm:$0xf]
      %v314 = vld [vmem:[%s247 + $0xb8] sm:$0xf]
      %v315 = vld [vmem:[%s247 + $0xbc] sm:$0xf]
      %v316 = vld [vmem:[%s247 + $0xc0] sm:$0xf]
      %v317 = vld [vmem:[%s247 + $0xc4] sm:$0xf]
      %v318 = vld [vmem:[%s247 + $0xc8] sm:$0xf]
      %v319 = vld [vmem:[%s247 + $0xcc] sm:$0xf]
      %v320 = vld [vmem:[%s247 + $0xd0] sm:$0xf]
      %v321 = vld [vmem:[%s247 + $0xd4] sm:$0xf]
      %v322 = vld [vmem:[%s247 + $0xd8] sm:$0xf]
      %v323 = vld [vmem:[%s247 + $0xdc] sm:$0xf]
      %v324 = vld [vmem:[%s247 + $0xe0] sm:$0xf]
      %v325 = vld [vmem:[%s247 + $0xe4] sm:$0xf]
      %v326 = vld [vmem:[%s247 + $0xe8] sm:$0xf]
      %v327 = vld [vmem:[%s247 + $0xec] sm:$0xf]
      %v328 = vld [vmem:[%s247 + $0xf0] sm:$0xf]
      %v329 = vld [vmem:[%s247 + $0xf4] sm:$0xf]
      %v330 = vld [vmem:[%s247 + $0xf8] sm:$0xf]
      %v331 = vld [vmem:[%s247 + $0xfc] sm:$0xf]
      %v334 = vunpack.c.l.b16 %v266
      %v335 = vunpack.c.h.b16 %v266
      %v336 = vunpack.c.l.b16 %v267
      %v337 = vunpack.c.h.b16 %v267
      %v338 = vpack.c.b16 %v334, %v334
      %v339 = vpack.c.b16 %v335, %v335
      %v340 = vpack.c.b16 %v336, %v336
      %v341 = vpack.c.b16 %v337, %v337
      %v410 = vunpack.c.l.b16 %v268
      %v411 = vunpack.c.l.b16 %v269
      %v412 = vunpack.c.l.b16 %v270
      %v413 = vunpack.c.l.b16 %v271
      %v414 = vunpack.c.l.b16 %v272
      %v415 = vunpack.c.l.b16 %v273
      %v416 = vunpack.c.l.b16 %v274
      %v417 = vunpack.c.l.b16 %v275
      %v418 = vunpack.c.l.b16 %v276
      %v419 = vunpack.c.l.b16 %v277
      %v420 = vunpack.c.l.b16 %v278
      %v421 = vunpack.c.l.b16 %v279
      %v422 = vunpack.c.l.b16 %v280
      %v423 = vunpack.c.l.b16 %v281
      %v424 = vunpack.c.l.b16 %v282
      %v425 = vunpack.c.l.b16 %v283
      %v426 = vunpack.c.l.b16 %v284
      %v427 = vunpack.c.l.b16 %v285
      %v428 = vunpack.c.l.b16 %v286
      %v429 = vunpack.c.l.b16 %v287
      %v430 = vunpack.c.l.b16 %v288
      %v431 = vunpack.c.l.b16 %v289
      %v432 = vunpack.c.l.b16 %v290
      %v433 = vunpack.c.l.b16 %v291
      %v434 = vunpack.c.l.b16 %v292
      %v435 = vunpack.c.l.b16 %v293
      %v436 = vunpack.c.l.b16 %v294
      %v437 = vunpack.c.l.b16 %v295
      %v438 = vunpack.c.l.b16 %v296
      %v439 = vunpack.c.l.b16 %v297
      %v440 = vunpack.c.l.b16 %v298
      %v441 = vunpack.c.l.b16 %v299
      %v442 = vunpack.c.l.b16 %v300
      %v443 = vunpack.c.l.b16 %v301
      %v444 = vunpack.c.l.b16 %v302
      %v445 = vunpack.c.l.b16 %v303
      %v446 = vunpack.c.l.b16 %v304
      %v447 = vunpack.c.l.b16 %v305
      %v448 = vunpack.c.l.b16 %v306
      %v449 = vunpack.c.l.b16 %v307
      %v450 = vunpack.c.l.b16 %v308
      %v451 = vunpack.c.l.b16 %v309
      %v452 = vunpack.c.l.b16 %v310
      %v453 = vunpack.c.l.b16 %v311
      %v454 = vunpack.c.l.b16 %v312
      %v455 = vunpack.c.l.b16 %v313
      %v456 = vunpack.c.l.b16 %v314
      %v457 = vunpack.c.l.b16 %v315
      %v458 = vunpack.c.l.b16 %v316
      %v459 = vunpack.c.l.b16 %v317
      %v460 = vunpack.c.l.b16 %v318
      %v461 = vunpack.c.l.b16 %v319
      %v462 = vunpack.c.l.b16 %v320
      %v463 = vunpack.c.l.b16 %v321
      %v464 = vunpack.c.l.b16 %v322
      %v465 = vunpack.c.l.b16 %v323
      %v466 = vunpack.c.l.b16 %v324
      %v467 = vunpack.c.l.b16 %v325
      %v468 = vunpack.c.l.b16 %v326
      %v469 = vunpack.c.l.b16 %v327
      %v470 = vunpack.c.l.b16 %v328
      %v471 = vunpack.c.l.b16 %v329
      %v472 = vunpack.c.l.b16 %v330
      %v473 = vunpack.c.l.b16 %v331
      %v474 = vpack.c.b16 %v411, %v410
      %v475 = vpack.c.b16 %v413, %v412
      %v476 = vpack.c.b16 %v415, %v414
      %v477 = vpack.c.b16 %v417, %v416
      %v478 = vpack.c.b16 %v419, %v418
      %v479 = vpack.c.b16 %v421, %v420
      %v480 = vpack.c.b16 %v423, %v422
      %v481 = vpack.c.b16 %v425, %v424
      %v482 = vpack.c.b16 %v427, %v426
      %v483 = vpack.c.b16 %v429, %v428
      %v484 = vpack.c.b16 %v431, %v430
      %v485 = vpack.c.b16 %v433, %v432
      %v486 = vpack.c.b16 %v435, %v434
      %v487 = vpack.c.b16 %v437, %v436
      %v488 = vpack.c.b16 %v439, %v438
      %v489 = vpack.c.b16 %v441, %v440
      %v490 = vpack.c.b16 %v443, %v442
      %v491 = vpack.c.b16 %v445, %v444
      %v492 = vpack.c.b16 %v447, %v446
      %v493 = vpack.c.b16 %v449, %v448
      %v494 = vpack.c.b16 %v451, %v450
      %v495 = vpack.c.b16 %v453, %v452
      %v496 = vpack.c.b16 %v455, %v454
      %v497 = vpack.c.b16 %v457, %v456
      %v498 = vpack.c.b16 %v459, %v458
      %v499 = vpack.c.b16 %v461, %v460
      %v500 = vpack.c.b16 %v463, %v462
      %v501 = vpack.c.b16 %v465, %v464
      %v502 = vpack.c.b16 %v467, %v466
      %v503 = vpack.c.b16 %v469, %v468
      %v504 = vpack.c.b16 %v471, %v470
      %v505 = vpack.c.b16 %v473, %v472
      %538 = vmatprep.subr.bf16.mxu0 0
      %539 = vmatpush1.bf16.msra.mxu0 %v474
      %540 = vmatprep.subr.bf16.mxu0 0
      %541 = vmatpush1.bf16.msra.mxu0 %v475
      %542 = vmatprep.subr.bf16.mxu0 0
      %543 = vmatpush1.bf16.msra.mxu0 %v476
      %544 = vmatprep.subr.bf16.mxu0 0
      %545 = vmatpush1.bf16.msra.mxu0 %v477
      %546 = vmatprep.subr.bf16.mxu0 0
      %547 = vmatpush1.bf16.msra.mxu0 %v478
      %548 = vmatprep.subr.bf16.mxu0 0
      %549 = vmatpush1.bf16.msra.mxu0 %v479
      %550 = vmatprep.subr.bf16.mxu0 0
      %551 = vmatpush1.bf16.msra.mxu0 %v480
      %552 = vmatprep.subr.bf16.mxu0 0
      %553 = vmatpush1.bf16.msra.mxu0 %v481
      %554 = vmatprep.subr.bf16.mxu0 0
      %555 = vmatpush1.bf16.msra.mxu0 %v482
      %556 = vmatprep.subr.bf16.mxu0 0
      %557 = vmatpush1.bf16.msra.mxu0 %v483
      %558 = vmatprep.subr.bf16.mxu0 0
      %559 = vmatpush1.bf16.msra.mxu0 %v484
      %560 = vmatprep.subr.bf16.mxu0 0
      %561 = vmatpush1.bf16.msra.mxu0 %v485
      %562 = vmatprep.subr.bf16.mxu0 0
      %563 = vmatpush1.bf16.msra.mxu0 %v486
      %564 = vmatprep.subr.bf16.mxu0 0
      %565 = vmatpush1.bf16.msra.mxu0 %v487
      %566 = vmatprep.subr.bf16.mxu0 0
      %567 = vmatpush1.bf16.msra.mxu0 %v488
      %568 = vmatprep.subr.bf16.mxu0 0
      %569 = vmatpush1.bf16.msra.mxu0 %v489
      %570 = vmatprep.mubr.bf16.mxu0 %v339
      %571 = vmatmul.mubr.bf16.gmra.mrb[0].mxu0 %v338
      %v572 = vpop.f32.mrb[0].mxu0
      %v573 = vadd.f32 0.0, %v572
      %v574 = vpop.f32.mrb[0].mxu0
      %v575 = vpop.f32.mrb[0].mxu0
      %v576 = vpop.f32.mrb[0].mxu0
      %577 = vdwg.mxu0
      %578 = vmatprep.subr.bf16.mxu0 0
      %579 = vmatpush1.bf16.msra.mxu0 %v490
      %580 = vmatprep.subr.bf16.mxu0 0
      %581 = vmatpush1.bf16.msra.mxu0 %v491
      %582 = vmatprep.subr.bf16.mxu0 0
      %583 = vmatpush1.bf16.msra.mxu0 %v492
      %584 = vmatprep.subr.bf16.mxu0 0
      %585 = vmatpush1.bf16.msra.mxu0 %v493
      %586 = vmatprep.subr.bf16.mxu0 0
      %587 = vmatpush1.bf16.msra.mxu0 %v494
      %588 = vmatprep.subr.bf16.mxu0 0
      %589 = vmatpush1.bf16.msra.mxu0 %v495
      %590 = vmatprep.subr.bf16.mxu0 0
      %591 = vmatpush1.bf16.msra.mxu0 %v496
      %592 = vmatprep.subr.bf16.mxu0 0
      %593 = vmatpush1.bf16.msra.mxu0 %v497
      %594 = vmatprep.subr.bf16.mxu0 0
      %595 = vmatpush1.bf16.msra.mxu0 %v498
      %596 = vmatprep.subr.bf16.mxu0 0
      %597 = vmatpush1.bf16.msra.mxu0 %v499
      %598 = vmatprep.subr.bf16.mxu0 0
      %599 = vmatpush1.bf16.msra.mxu0 %v500
      %600 = vmatprep.subr.bf16.mxu0 0
      %601 = vmatpush1.bf16.msra.mxu0 %v501
      %602 = vmatprep.subr.bf16.mxu0 0
      %603 = vmatpush1.bf16.msra.mxu0 %v502
      %604 = vmatprep.subr.bf16.mxu0 0
      %605 = vmatpush1.bf16.msra.mxu0 %v503
      %606 = vmatprep.subr.bf16.mxu0 0
      %607 = vmatpush1.bf16.msra.mxu0 %v504
      %608 = vmatprep.subr.bf16.mxu0 0
      %609 = vmatpush1.bf16.msra.mxu0 %v505
      %610 = vmatprep.mubr.bf16.mxu0 %v341
      %611 = vmatmul.mubr.bf16.gmra.mrb[0].mxu0 %v340
      %v612 = vpop.f32.mrb[0].mxu0
      %v613 = vadd.f32 %v573, %v612
      %v614 = vpop.f32.mrb[0].mxu0
      %v615 = vpop.f32.mrb[0].mxu0
      %v616 = vpop.f32.mrb[0].mxu0
      %617 = vdwg.mxu0
      %v618 = vadd.f32 %v265, %v613
      %619 = vst [vmem:[#allocation2] sm:$0xff] %v618
      %p620 = scmp.eq.s32.totalorder %s21, 3
      // Predicated region
      $region37: #{cnn_to_rnn_forward.6} parent=31 // pred_check
        %p621 = pneg %p620
      $region38: #{cnn_to_rnn_forward.6} parent=31 // pred_check_branch
        %623 = sbr.rel (%p621) target = $region40
      $region39: #{cnn_to_rnn_forward.6} parent=31 // pred_region
        %v624 = vld [vmem:[#allocation2] sm:$0xff]
        %v625 = vld [vmem:[%s251] sm:$0x1]
        %v627 = vlaneseq
        %v628 = vshrl.u32 %v627, 7
        %v629 = vsub.s32 0, %v628
        %v630 = vrot.slane %v625, %v629
        %v632 = vadd.f32 %v624, %v630
        %v633 = vmax.f32 %v632, 0.0
        %v634 = vpack.c.bf16 %v633, %v633
        %635 = vst [vmem:[%s258] sm:$0xf] %v634
      $region40: #{cnn_to_rnn_forward.6} parent=31 // pred_fallthru
        _
      %p636 = scmp.lt.s32.totalorder %s19, 0
      %s637 = scalar_select %p636, %s19, 0
      %p638 = scmp.lt.s32.totalorder %s20, 0
      %s639 = scalar_select %p638, %s20, 0
      %s640 = sadd.s32 %s639, %s637
      %s641 = smul.addr %s640, 4
      %s642 = scalar_lea.vmem %s3, %s641
      // Predicated region
      $region41: #{cnn_to_rnn_forward.6} parent=31 // pred_check
        %p643 = pneg %p135
      $region42: #{cnn_to_rnn_forward.6} parent=31 // pred_check_branch
        %645 = sbr.rel (%p643) target = $region44
      $region43: #{cnn_to_rnn_forward.6} parent=31 // pred_region
        _
      $region44: #{cnn_to_rnn_forward.6} parent=31 // pred_fallthru
        _
      // Predicated region
      $region45: #{cnn_to_rnn_forward.6} parent=31 // pred_check
        %p646 = pneg %p135
      $region46: #{cnn_to_rnn_forward.6} parent=31 // pred_check_branch
        %648 = sbr.rel (%p646) target = $region48
      $region47: #{cnn_to_rnn_forward.6} parent=31 // pred_region
        %p649 = scmp.lt.s32.totalorder %s19, 0
        %s650 = scalar_select %p649, %s19, 0
        %p651 = scmp.lt.s32.totalorder %s20, 0
        %s652 = scalar_select %p651, %s20, 0
        %s653 = sadd.s32 %s652, %s650
        %s654 = smul.addr %s653, 4
        %s655 = scalar_lea.vmem %s3, %s654
      $region48: #{cnn_to_rnn_forward.6} parent=31 // pred_fallthru
        _
    $region32: #{cnn_to_rnn_forward.6} parent=5 // pred_fallthru
      _
    %p656 = scmp.le.s32.totalorder 2, %s9
    // Predicated region
    $region49: #{cnn_to_rnn_forward.6} parent=5 // pred_check
      %p657 = pneg %p656
    $region50: #{cnn_to_rnn_forward.6} parent=5 // pred_check_branch
      %659 = sbr.rel (%p657) target = $region52
    $region51: #{cnn_to_rnn_forward.6} parent=5 // pred_region
      %s660 = ssub.s32 %s9, 2
    $region52: #{cnn_to_rnn_forward.6} parent=5 // pred_fallthru
      _
  $region6: #{cnn_to_rnn_forward.6} parent=0 // loop_footer
    %s13 = sadd.s32 1, %s9
  $region7: #{cnn_to_rnn_forward.6} parent=0 // loop_footer_branch
    %8 = sbr.rel target = $region3
  $region8: #{cnn_to_rnn_forward.6} parent=0 // loop_exit
    _

// kernel: cnn_to_rnn_forward.7
$region0: #{cnn_to_rnn_forward.7}
  #allocation0 [shape = 'u32[]', space=smem, size = 0x4, offset = 0x4, fixed_abs, tag = 'smem constant byte address 0x4 - core index']
  #allocation1 [shape = 'u32[144,128]{1,0:T(1,128)}', space=vmem, size = 0x12000, scoped, tag = 'internal scratch']
  #allocation2 [shape = 'f32[8,128]{1,0:T(8,128)}', space=vmem, size = 0x1000, scoped, tag = 'scratch operand']
  #allocation3 [shape = 'f32[8,128]{1,0:T(8,128)}', space=vmem, size = 0x1000, scoped, tag = 'scratch operand']
  #allocation4 [shape = 'f32[9,8,512]{2,1,0:T(8,128)}', space=vmem, size = 0x24000, scoped, tag = 'scratch operand']
  %s0 = inlined_call_operand.vmem [shape: bf16[9,8,128], index: 0, kind: input, shape index: {}]
  %s1 = inlined_call_operand.vmem [shape: bf16[128,512], index: 1, kind: input, shape index: {}]
  %s2 = inlined_call_operand.vmem [shape: bf16[128,512], index: 2, kind: input, shape index: {}]
  %s3 = inlined_call_operand.vmem [shape: f32[1,512], index: 3, kind: input, shape index: {}]
  %s4 = inlined_call_operand.vmem [shape: bf16[9,8,128], index: 4, kind: output, shape index: {}]
  %s5 = sld [smem:[#allocation0]]
  $region37: #{cnn_to_rnn_forward.7} parent=0
    _
  %s7 = ssub.s32 1, %s5
  %s8 = scalar_select 0, %s7, %s5
  // Predicated region
  $region2: #{cnn_to_rnn_forward.7} parent=0 // pred_check
    _
  $region3: #{cnn_to_rnn_forward.7} parent=0 // pred_check_branch
    %10 = sbr.rel (0) target = $region5
  $region4: #{cnn_to_rnn_forward.7} parent=0 // pred_region
    _
  $region5: #{cnn_to_rnn_forward.7} parent=0 // pred_fallthru
    _
  // Predicated region
  $region6: #{cnn_to_rnn_forward.7} parent=0 // pred_check
    _
  $region7: #{cnn_to_rnn_forward.7} parent=0 // pred_check_branch
    %12 = sbr.rel (0) target = $region9
  $region8: #{cnn_to_rnn_forward.7} parent=0 // pred_region
    _
  $region9: #{cnn_to_rnn_forward.7} parent=0 // pred_fallthru
    _
  // Predicated region
  $region10: #{cnn_to_rnn_forward.7} parent=0 // pred_check
    _
  $region11: #{cnn_to_rnn_forward.7} parent=0 // pred_check_branch
    %14 = sbr.rel (0) target = $region13
  $region12: #{cnn_to_rnn_forward.7} parent=0 // pred_region
    _
  $region13: #{cnn_to_rnn_forward.7} parent=0 // pred_fallthru
    _
  // Predicated region
  $region14: #{cnn_to_rnn_forward.7} parent=0 // pred_check
    _
  $region15: #{cnn_to_rnn_forward.7} parent=0 // pred_check_branch
    %16 = sbr.rel (0) target = $region17
  $region16: #{cnn_to_rnn_forward.7} parent=0 // pred_region
    _
  $region17: #{cnn_to_rnn_forward.7} parent=0 // pred_fallthru
    _
  %p18 = scmp.eq.s32.totalorder 0, 0
  // Predicated region
  $region18: #{cnn_to_rnn_forward.7} parent=0 // pred_check
    %p19 = pneg %p18
  $region19: #{cnn_to_rnn_forward.7} parent=0 // pred_check_branch
    %21 = sbr.rel (%p19) target = $region21
  $region20: #{cnn_to_rnn_forward.7} parent=0 // pred_region
    %22 = vst [vmem:[#allocation2] sm:$0xff] 0.0
    %23 = vst [vmem:[#allocation3] sm:$0xff] 0.0
  $region21: #{cnn_to_rnn_forward.7} parent=0 // pred_fallthru
    _
  %v24 = vld [vmem:[%s0] sm:$0xf]
  %v25 = vld [vmem:[%s0 + $0x4] sm:$0xf]
  %v26 = vld [vmem:[%s0 + $0x8] sm:$0xf]
  %v27 = vld [vmem:[%s0 + $0xc] sm:$0xf]
  %v28 = vld [vmem:[%s0 + $0x10] sm:$0xf]
  %v29 = vld [vmem:[%s0 + $0x14] sm:$0xf]
  %v30 = vld [vmem:[%s0 + $0x18] sm:$0xf]
  %v31 = vld [vmem:[%s0 + $0x1c] sm:$0xf]
  %v32 = vld [vmem:[%s0 + $0x20] sm:$0xf]
  %v33 = vld [vmem:[%s1] sm:$0xff]
  %v34 = vld [vmem:[%s1 + $0x8] sm:$0xff]
  %v35 = vld [vmem:[%s1 + $0x10] sm:$0xff]
  %v36 = vld [vmem:[%s1 + $0x18] sm:$0xff]
  %v37 = vld [vmem:[%s1 + $0x20] sm:$0xff]
  %v38 = vld [vmem:[%s1 + $0x28] sm:$0xff]
  %v39 = vld [vmem:[%s1 + $0x30] sm:$0xff]
  %v40 = vld [vmem:[%s1 + $0x38] sm:$0xff]
  %v41 = vld [vmem:[%s1 + $0x40] sm:$0xff]
  %v42 = vld [vmem:[%s1 + $0x48] sm:$0xff]
  %v43 = vld [vmem:[%s1 + $0x50] sm:$0xff]
  %v44 = vld [vmem:[%s1 + $0x58] sm:$0xff]
  %v45 = vld [vmem:[%s1 + $0x60] sm:$0xff]
  %v46 = vld [vmem:[%s1 + $0x68] sm:$0xff]
  %v47 = vld [vmem:[%s1 + $0x70] sm:$0xff]
  %v48 = vld [vmem:[%s1 + $0x78] sm:$0xff]
  %v49 = vld [vmem:[%s1 + $0x80] sm:$0xff]
  %v50 = vld [vmem:[%s1 + $0x88] sm:$0xff]
  %v51 = vld [vmem:[%s1 + $0x90] sm:$0xff]
  %v52 = vld [vmem:[%s1 + $0x98] sm:$0xff]
  %v53 = vld [vmem:[%s1 + $0xa0] sm:$0xff]
  %v54 = vld [vmem:[%s1 + $0xa8] sm:$0xff]
  %v55 = vld [vmem:[%s1 + $0xb0] sm:$0xff]
  %v56 = vld [vmem:[%s1 + $0xb8] sm:$0xff]
  %v57 = vld [vmem:[%s1 + $0xc0] sm:$0xff]
  %v58 = vld [vmem:[%s1 + $0xc8] sm:$0xff]
  %v59 = vld [vmem:[%s1 + $0xd0] sm:$0xff]
  %v60 = vld [vmem:[%s1 + $0xd8] sm:$0xff]
  %v61 = vld [vmem:[%s1 + $0xe0] sm:$0xff]
  %v62 = vld [vmem:[%s1 + $0xe8] sm:$0xff]
  %v63 = vld [vmem:[%s1 + $0xf0] sm:$0xff]
  %v64 = vld [vmem:[%s1 + $0xf8] sm:$0xff]
  %v65 = vld [vmem:[%s3] sm:$0xf]
  %v67 = vlaneseq
  %v68 = vshrl.u32 %v67, 7
  %v69 = vsub.s32 0, %v68
  %v70 = vrot.slane %v65, %v69
  %v71 = vlaneseq
  %v72 = vshrl.u32 %v71, 7
  %v73 = vsub.s32 1, %v72
  %v74 = vrot.slane %v65, %v73
  %v75 = vlaneseq
  %v76 = vshrl.u32 %v75, 7
  %v77 = vsub.s32 2, %v76
  %v78 = vrot.slane %v65, %v77
  %v79 = vlaneseq
  %v80 = vshrl.u32 %v79, 7
  %v81 = vsub.s32 3, %v80
  %v82 = vrot.slane %v65, %v81
  %v96 = vunpack.c.l.b16 %v24
  %v97 = vunpack.c.l.b16 %v25
  %v98 = vunpack.c.l.b16 %v26
  %v99 = vunpack.c.l.b16 %v27
  %v100 = vunpack.c.l.b16 %v28
  %v101 = vunpack.c.l.b16 %v29
  %v102 = vunpack.c.l.b16 %v30
  %v103 = vunpack.c.l.b16 %v31
  %v104 = vunpack.c.l.b16 %v32
  %v105 = vpack.c.b16 %v97, %v96
  %v106 = vpack.c.b16 %v99, %v98
  %v107 = vpack.c.b16 %v101, %v100
  %v108 = vpack.c.b16 %v103, %v102
  %v109 = vpack.c.b16 %v104, %v104
  %v147 = vunpack.c.l.b16 %v33
  %v148 = vunpack.c.h.b16 %v33
  %v149 = vunpack.c.l.b16 %v34
  %v150 = vunpack.c.h.b16 %v34
  %v151 = vunpack.c.l.b16 %v35
  %v152 = vunpack.c.h.b16 %v35
  %v153 = vunpack.c.l.b16 %v36
  %v154 = vunpack.c.h.b16 %v36
  %v155 = vunpack.c.l.b16 %v37
  %v156 = vunpack.c.h.b16 %v37
  %v157 = vunpack.c.l.b16 %v38
  %v158 = vunpack.c.h.b16 %v38
  %v159 = vunpack.c.l.b16 %v39
  %v160 = vunpack.c.h.b16 %v39
  %v161 = vunpack.c.l.b16 %v40
  %v162 = vunpack.c.h.b16 %v40
  %v163 = vunpack.c.l.b16 %v41
  %v164 = vunpack.c.h.b16 %v41
  %v165 = vunpack.c.l.b16 %v42
  %v166 = vunpack.c.h.b16 %v42
  %v167 = vunpack.c.l.b16 %v43
  %v168 = vunpack.c.h.b16 %v43
  %v169 = vunpack.c.l.b16 %v44
  %v170 = vunpack.c.h.b16 %v44
  %v171 = vunpack.c.l.b16 %v45
  %v172 = vunpack.c.h.b16 %v45
  %v173 = vunpack.c.l.b16 %v46
  %v174 = vunpack.c.h.b16 %v46
  %v175 = vunpack.c.l.b16 %v47
  %v176 = vunpack.c.h.b16 %v47
  %v177 = vunpack.c.l.b16 %v48
  %v178 = vunpack.c.h.b16 %v48
  %v179 = vunpack.c.l.b16 %v49
  %v180 = vunpack.c.h.b16 %v49
  %v181 = vunpack.c.l.b16 %v50
  %v182 = vunpack.c.h.b16 %v50
  %v183 = vunpack.c.l.b16 %v51
  %v184 = vunpack.c.h.b16 %v51
  %v185 = vunpack.c.l.b16 %v52
  %v186 = vunpack.c.h.b16 %v52
  %v187 = vunpack.c.l.b16 %v53
  %v188 = vunpack.c.h.b16 %v53
  %v189 = vunpack.c.l.b16 %v54
  %v190 = vunpack.c.h.b16 %v54
  %v191 = vunpack.c.l.b16 %v55
  %v192 = vunpack.c.h.b16 %v55
  %v193 = vunpack.c.l.b16 %v56
  %v194 = vunpack.c.h.b16 %v56
  %v195 = vunpack.c.l.b16 %v57
  %v196 = vunpack.c.h.b16 %v57
  %v197 = vunpack.c.l.b16 %v58
  %v198 = vunpack.c.h.b16 %v58
  %v199 = vunpack.c.l.b16 %v59
  %v200 = vunpack.c.h.b16 %v59
  %v201 = vunpack.c.l.b16 %v60
  %v202 = vunpack.c.h.b16 %v60
  %v203 = vunpack.c.l.b16 %v61
  %v204 = vunpack.c.h.b16 %v61
  %v205 = vunpack.c.l.b16 %v62
  %v206 = vunpack.c.h.b16 %v62
  %v207 = vunpack.c.l.b16 %v63
  %v208 = vunpack.c.h.b16 %v63
  %v209 = vunpack.c.l.b16 %v64
  %v210 = vunpack.c.h.b16 %v64
  %v211 = vpack.c.b16 %v151, %v147
  %v212 = vpack.c.b16 %v152, %v148
  %v213 = vpack.c.b16 %v153, %v149
  %v214 = vpack.c.b16 %v154, %v150
  %v215 = vpack.c.b16 %v159, %v155
  %v216 = vpack.c.b16 %v160, %v156
  %v217 = vpack.c.b16 %v161, %v157
  %v218 = vpack.c.b16 %v162, %v158
  %v219 = vpack.c.b16 %v167, %v163
  %v220 = vpack.c.b16 %v168, %v164
  %v221 = vpack.c.b16 %v169, %v165
  %v222 = vpack.c.b16 %v170, %v166
  %v223 = vpack.c.b16 %v175, %v171
  %v224 = vpack.c.b16 %v176, %v172
  %v225 = vpack.c.b16 %v177, %v173
  %v226 = vpack.c.b16 %v178, %v174
  %v227 = vpack.c.b16 %v183, %v179
  %v228 = vpack.c.b16 %v184, %v180
  %v229 = vpack.c.b16 %v185, %v181
  %v230 = vpack.c.b16 %v186, %v182
  %v231 = vpack.c.b16 %v191, %v187
  %v232 = vpack.c.b16 %v192, %v188
  %v233 = vpack.c.b16 %v193, %v189
  %v234 = vpack.c.b16 %v194, %v190
  %v235 = vpack.c.b16 %v199, %v195
  %v236 = vpack.c.b16 %v200, %v196
  %v237 = vpack.c.b16 %v201, %v197
  %v238 = vpack.c.b16 %v202, %v198
  %v239 = vpack.c.b16 %v207, %v203
  %v240 = vpack.c.b16 %v208, %v204
  %v241 = vpack.c.b16 %v209, %v205
  %v242 = vpack.c.b16 %v210, %v206
  %275 = vmatprep.subr.bf16.mxu0 %v212
  %276 = vmatpush1.bf16.msra.mxu0 %v211
  %277 = vmatprep.subr.bf16.mxu0 %v216
  %278 = vmatpush1.bf16.msra.mxu0 %v215
  %279 = vmatprep.subr.bf16.mxu0 %v220
  %280 = vmatpush1.bf16.msra.mxu0 %v219
  %281 = vmatprep.subr.bf16.mxu0 %v224
  %282 = vmatpush1.bf16.msra.mxu0 %v223
  %283 = vmatprep.subr.bf16.mxu0 %v228
  %284 = vmatpush1.bf16.msra.mxu0 %v227
  %285 = vmatprep.subr.bf16.mxu0 %v232
  %286 = vmatpush1.bf16.msra.mxu0 %v231
  %287 = vmatprep.subr.bf16.mxu0 %v236
  %288 = vmatpush1.bf16.msra.mxu0 %v235
  %289 = vmatprep.subr.bf16.mxu0 %v240
  %290 = vmatpush1.bf16.msra.mxu0 %v239
  %291 = vmatprep.subr.bf16.mxu0 0
  %292 = vmatpush1.bf16.msra.mxu0 0
  %293 = vmatprep.subr.bf16.mxu0 0
  %294 = vmatpush1.bf16.msra.mxu0 0
  %295 = vmatprep.subr.bf16.mxu0 0
  %296 = vmatpush1.bf16.msra.mxu0 0
  %297 = vmatprep.subr.bf16.mxu0 0
  %298 = vmatpush1.bf16.msra.mxu0 0
  %299 = vmatprep.subr.bf16.mxu0 0
  %300 = vmatpush1.bf16.msra.mxu0 0
  %301 = vmatprep.subr.bf16.mxu0 0
  %302 = vmatpush1.bf16.msra.mxu0 0
  %303 = vmatprep.subr.bf16.mxu0 0
  %304 = vmatpush1.bf16.msra.mxu0 0
  %305 = vmatprep.subr.bf16.mxu0 0
  %306 = vmatpush1.bf16.msra.mxu0 0
  %307 = vmatprep.mubr.bf16.mxu0 0
  %308 = vmatmul.mubr.bf16.gmra.mrb[0].mxu0 %v105
  %v309 = vpop.f32.mrb[0].mxu0
  %v310 = vadd.f32 %v70, %v309
  %v311 = vpop.f32.mrb[0].mxu0
  %v312 = vadd.f32 %v74, %v311
  %v313 = vpop.f32.mrb[0].mxu0
  %v314 = vadd.f32 %v70, %v313
  %v315 = vpop.f32.mrb[0].mxu0
  %v316 = vadd.f32 %v74, %v315
  %317 = vmatprep.mubr.bf16.mxu0 0
  %318 = vmatmul.mubr.bf16.gmra.mrb[0].mxu0 %v106
  %v319 = vpop.f32.mrb[0].mxu0
  %v320 = vadd.f32 %v70, %v319
  %v321 = vpop.f32.mrb[0].mxu0
  %v322 = vadd.f32 %v74, %v321
  %v323 = vpop.f32.mrb[0].mxu0
  %v324 = vadd.f32 %v70, %v323
  %v325 = vpop.f32.mrb[0].mxu0
  %v326 = vadd.f32 %v74, %v325
  %327 = vmatprep.mubr.bf16.mxu0 0
  %328 = vmatmul.mubr.bf16.gmra.mrb[0].mxu0 %v107
  %v329 = vpop.f32.mrb[0].mxu0
  %v330 = vadd.f32 %v70, %v329
  %v331 = vpop.f32.mrb[0].mxu0
  %v332 = vadd.f32 %v74, %v331
  %v333 = vpop.f32.mrb[0].mxu0
  %v334 = vadd.f32 %v70, %v333
  %v335 = vpop.f32.mrb[0].mxu0
  %v336 = vadd.f32 %v74, %v335
  %337 = vmatprep.mubr.bf16.mxu0 0
  %338 = vmatmul.mubr.bf16.gmra.mrb[0].mxu0 %v108
  %v339 = vpop.f32.mrb[0].mxu0
  %v340 = vadd.f32 %v70, %v339
  %v341 = vpop.f32.mrb[0].mxu0
  %v342 = vadd.f32 %v74, %v341
  %v343 = vpop.f32.mrb[0].mxu0
  %v344 = vadd.f32 %v70, %v343
  %v345 = vpop.f32.mrb[0].mxu0
  %v346 = vadd.f32 %v74, %v345
  %347 = vmatprep.mubr.bf16.mxu0 0
  %348 = vmatmul.mubr.bf16.gmra.mrb[0].mxu0 %v109
  %v349 = vpop.f32.mrb[0].mxu0
  %v350 = vadd.f32 %v70, %v349
  %v351 = vpop.f32.mrb[0].mxu0
  %v352 = vadd.f32 %v74, %v351
  %v353 = vpop.f32.mrb[0].mxu0
  %v354 = vpop.f32.mrb[0].mxu0
  %355 = vdwg.mxu0
  %356 = vmatprep.subr.bf16.mxu0 %v214
  %357 = vmatpush1.bf16.msra.mxu0 %v213
  %358 = vmatprep.subr.bf16.mxu0 %v218
  %359 = vmatpush1.bf16.msra.mxu0 %v217
  %360 = vmatprep.subr.bf16.mxu0 %v222
  %361 = vmatpush1.bf16.msra.mxu0 %v221
  %362 = vmatprep.subr.bf16.mxu0 %v226
  %363 = vmatpush1.bf16.msra.mxu0 %v225
  %364 = vmatprep.subr.bf16.mxu0 %v230
  %365 = vmatpush1.bf16.msra.mxu0 %v229
  %366 = vmatprep.subr.bf16.mxu0 %v234
  %367 = vmatpush1.bf16.msra.mxu0 %v233
  %368 = vmatprep.subr.bf16.mxu0 %v238
  %369 = vmatpush1.bf16.msra.mxu0 %v237
  %370 = vmatprep.subr.bf16.mxu0 %v242
  %371 = vmatpush1.bf16.msra.mxu0 %v241
  %372 = vmatprep.subr.bf16.mxu0 0
  %373 = vmatpush1.bf16.msra.mxu0 0
  %374 = vmatprep.subr.bf16.mxu0 0
  %375 = vmatpush1.bf16.msra.mxu0 0
  %376 = vmatprep.subr.bf16.mxu0 0
  %377 = vmatpush1.bf16.msra.mxu0 0
  %378 = vmatprep.subr.bf16.mxu0 0
  %379 = vmatpush1.bf16.msra.mxu0 0
  %380 = vmatprep.subr.bf16.mxu0 0
  %381 = vmatpush1.bf16.msra.mxu0 0
  %382 = vmatprep.subr.bf16.mxu0 0
  %383 = vmatpush1.bf16.msra.mxu0 0
  %384 = vmatprep.subr.bf16.mxu0 0
  %385 = vmatpush1.bf16.msra.mxu0 0
  %386 = vmatprep.subr.bf16.mxu0 0
  %387 = vmatpush1.bf16.msra.mxu0 0
  %388 = vmatprep.mubr.bf16.mxu0 0
  %389 = vmatmul.mubr.bf16.gmra.mrb[0].mxu0 %v105
  %v390 = vpop.f32.mrb[0].mxu0
  %v391 = vadd.f32 %v78, %v390
  %v392 = vpop.f32.mrb[0].mxu0
  %v393 = vadd.f32 %v82, %v392
  %v394 = vpop.f32.mrb[0].mxu0
  %v395 = vadd.f32 %v78, %v394
  %v396 = vpop.f32.mrb[0].mxu0
  %v397 = vadd.f32 %v82, %v396
  %398 = vmatprep.mubr.bf16.mxu0 0
  %399 = vmatmul.mubr.bf16.gmra.mrb[0].mxu0 %v106
  %v400 = vpop.f32.mrb[0].mxu0
  %v401 = vadd.f32 %v78, %v400
  %v402 = vpop.f32.mrb[0].mxu0
  %v403 = vadd.f32 %v82, %v402
  %v404 = vpop.f32.mrb[0].mxu0
  %v405 = vadd.f32 %v78, %v404
  %v406 = vpop.f32.mrb[0].mxu0
  %v407 = vadd.f32 %v82, %v406
  %408 = vmatprep.mubr.bf16.mxu0 0
  %409 = vmatmul.mubr.bf16.gmra.mrb[0].mxu0 %v107
  %v410 = vpop.f32.mrb[0].mxu0
  %v411 = vadd.f32 %v78, %v410
  %v412 = vpop.f32.mrb[0].mxu0
  %v413 = vadd.f32 %v82, %v412
  %v414 = vpop.f32.mrb[0].mxu0
  %v415 = vadd.f32 %v78, %v414
  %v416 = vpop.f32.mrb[0].mxu0
  %v417 = vadd.f32 %v82, %v416
  %418 = vmatprep.mubr.bf16.mxu0 0
  %419 = vmatmul.mubr.bf16.gmra.mrb[0].mxu0 %v108
  %v420 = vpop.f32.mrb[0].mxu0
  %v421 = vadd.f32 %v78, %v420
  %v422 = vpop.f32.mrb[0].mxu0
  %v423 = vadd.f32 %v82, %v422
  %v424 = vpop.f32.mrb[0].mxu0
  %v425 = vadd.f32 %v78, %v424
  %v426 = vpop.f32.mrb[0].mxu0
  %v427 = vadd.f32 %v82, %v426
  %428 = vmatprep.mubr.bf16.mxu0 0
  %429 = vmatmul.mubr.bf16.gmra.mrb[0].mxu0 %v109
  %v430 = vpop.f32.mrb[0].mxu0
  %v431 = vadd.f32 %v78, %v430
  %v432 = vpop.f32.mrb[0].mxu0
  %v433 = vadd.f32 %v82, %v432
  %v434 = vpop.f32.mrb[0].mxu0
  %v435 = vpop.f32.mrb[0].mxu0
  %436 = vdwg.mxu0
  %437 = vst [vmem:[#allocation4] sm:$0xff] %v310
  %438 = vst [vmem:[#allocation4 + $0x8] sm:$0xff] %v312
  %439 = vst [vmem:[#allocation4 + $0x10] sm:$0xff] %v391
  %440 = vst [vmem:[#allocation4 + $0x18] sm:$0xff] %v393
  %441 = vst [vmem:[#allocation4 + $0x20] sm:$0xff] %v314
  %442 = vst [vmem:[#allocation4 + $0x28] sm:$0xff] %v316
  %443 = vst [vmem:[#allocation4 + $0x30] sm:$0xff] %v395
  %444 = vst [vmem:[#allocation4 + $0x38] sm:$0xff] %v397
  %445 = vst [vmem:[#allocation4 + $0x40] sm:$0xff] %v320
  %446 = vst [vmem:[#allocation4 + $0x48] sm:$0xff] %v322
  %447 = vst [vmem:[#allocation4 + $0x50] sm:$0xff] %v401
  %448 = vst [vmem:[#allocation4 + $0x58] sm:$0xff] %v403
  %449 = vst [vmem:[#allocation4 + $0x60] sm:$0xff] %v324
  %450 = vst [vmem:[#allocation4 + $0x68] sm:$0xff] %v326
  %451 = vst [vmem:[#allocation4 + $0x70] sm:$0xff] %v405
  %452 = vst [vmem:[#allocation4 + $0x78] sm:$0xff] %v407
  %453 = vst [vmem:[#allocation4 + $0x80] sm:$0xff] %v330
  %454 = vst [vmem:[#allocation4 + $0x88] sm:$0xff] %v332
  %455 = vst [vmem:[#allocation4 + $0x90] sm:$0xff] %v411
  %456 = vst [vmem:[#allocation4 + $0x98] sm:$0xff] %v413
  %457 = vst [vmem:[#allocation4 + $0xa0] sm:$0xff] %v334
  %458 = vst [vmem:[#allocation4 + $0xa8] sm:$0xff] %v336
  %459 = vst [vmem:[#allocation4 + $0xb0] sm:$0xff] %v415
  %460 = vst [vmem:[#allocation4 + $0xb8] sm:$0xff] %v417
  %461 = vst [vmem:[#allocation4 + $0xc0] sm:$0xff] %v340
  %462 = vst [vmem:[#allocation4 + $0xc8] sm:$0xff] %v342
  %463 = vst [vmem:[#allocation4 + $0xd0] sm:$0xff] %v421
  %464 = vst [vmem:[#allocation4 + $0xd8] sm:$0xff] %v423
  %465 = vst [vmem:[#allocation4 + $0xe0] sm:$0xff] %v344
  %466 = vst [vmem:[#allocation4 + $0xe8] sm:$0xff] %v346
  %467 = vst [vmem:[#allocation4 + $0xf0] sm:$0xff] %v425
  %468 = vst [vmem:[#allocation4 + $0xf8] sm:$0xff] %v427
  %469 = vst [vmem:[#allocation4 + $0x100] sm:$0xff] %v350
  %470 = vst [vmem:[#allocation4 + $0x108] sm:$0xff] %v352
  %471 = vst [vmem:[#allocation4 + $0x110] sm:$0xff] %v431
  %472 = vst [vmem:[#allocation4 + $0x118] sm:$0xff] %v433
  loop: start=0, step=1, limit=9
  $region22: #{cnn_to_rnn_forward.7} parent=0 // loop_pre_header
    _
  $region23: #{cnn_to_rnn_forward.7} parent=0 // loop_header
    %s474 = sphi 0, %s478
    %p475 = scmp.ge.s32.totalorder %s474, 9
  $region24: #{cnn_to_rnn_forward.7} parent=0 // loop_header_branch
    %477 = sbr.rel (%p475) target = $region28
  $region25: #{cnn_to_rnn_forward.7} parent=0 // loop_body
    %s479 = smul.u32 %s474, 4
    %s480 = smul.addr %s479, 8
    %s481 = scalar_lea.vmem [#allocation4], %s480
    %v482 = vld [vmem:[%s481] sm:$0xff]
    %v483 = vld [vmem:[%s481 + $0x8] sm:$0xff]
    %v484 = vld [vmem:[%s481 + $0x10] sm:$0xff]
    %v485 = vld [vmem:[%s481 + $0x18] sm:$0xff]
    %v486 = vld [vmem:[#allocation2] sm:$0xff]
    %v487 = vpack.c.bf16 %v486, %v486
    %v488 = vld [vmem:[%s2] sm:$0xff]
    %v489 = vld [vmem:[%s2 + $0x8] sm:$0xff]
    %v490 = vld [vmem:[%s2 + $0x10] sm:$0xff]
    %v491 = vld [vmem:[%s2 + $0x18] sm:$0xff]
    %v492 = vld [vmem:[%s2 + $0x20] sm:$0xff]
    %v493 = vld [vmem:[%s2 + $0x28] sm:$0xff]
    %v494 = vld [vmem:[%s2 + $0x30] sm:$0xff]
    %v495 = vld [vmem:[%s2 + $0x38] sm:$0xff]
    %v496 = vld [vmem:[%s2 + $0x40] sm:$0xff]
    %v497 = vld [vmem:[%s2 + $0x48] sm:$0xff]
    %v498 = vld [vmem:[%s2 + $0x50] sm:$0xff]
    %v499 = vld [vmem:[%s2 + $0x58] sm:$0xff]
    %v500 = vld [vmem:[%s2 + $0x60] sm:$0xff]
    %v501 = vld [vmem:[%s2 + $0x68] sm:$0xff]
    %v502 = vld [vmem:[%s2 + $0x70] sm:$0xff]
    %v503 = vld [vmem:[%s2 + $0x78] sm:$0xff]
    %v504 = vld [vmem:[%s2 + $0x80] sm:$0xff]
    %v505 = vld [vmem:[%s2 + $0x88] sm:$0xff]
    %v506 = vld [vmem:[%s2 + $0x90] sm:$0xff]
    %v507 = vld [vmem:[%s2 + $0x98] sm:$0xff]
    %v508 = vld [vmem:[%s2 + $0xa0] sm:$0xff]
    %v509 = vld [vmem:[%s2 + $0xa8] sm:$0xff]
    %v510 = vld [vmem:[%s2 + $0xb0] sm:$0xff]
    %v511 = vld [vmem:[%s2 + $0xb8] sm:$0xff]
    %v512 = vld [vmem:[%s2 + $0xc0] sm:$0xff]
    %v513 = vld [vmem:[%s2 + $0xc8] sm:$0xff]
    %v514 = vld [vmem:[%s2 + $0xd0] sm:$0xff]
    %v515 = vld [vmem:[%s2 + $0xd8] sm:$0xff]
    %v516 = vld [vmem:[%s2 + $0xe0] sm:$0xff]
    %v517 = vld [vmem:[%s2 + $0xe8] sm:$0xff]
    %v518 = vld [vmem:[%s2 + $0xf0] sm:$0xff]
    %v519 = vld [vmem:[%s2 + $0xf8] sm:$0xff]
    %v552 = vunpack.c.l.b16 %v488
    %v553 = vunpack.c.h.b16 %v488
    %v554 = vunpack.c.l.b16 %v489
    %v555 = vunpack.c.h.b16 %v489
    %v556 = vunpack.c.l.b16 %v490
    %v557 = vunpack.c.h.b16 %v490
    %v558 = vunpack.c.l.b16 %v491
    %v559 = vunpack.c.h.b16 %v491
    %v560 = vunpack.c.l.b16 %v492
    %v561 = vunpack.c.h.b16 %v492
    %v562 = vunpack.c.l.b16 %v493
    %v563 = vunpack.c.h.b16 %v493
    %v564 = vunpack.c.l.b16 %v494
    %v565 = vunpack.c.h.b16 %v494
    %v566 = vunpack.c.l.b16 %v495
    %v567 = vunpack.c.h.b16 %v495
    %v568 = vunpack.c.l.b16 %v496
    %v569 = vunpack.c.h.b16 %v496
    %v570 = vunpack.c.l.b16 %v497
    %v571 = vunpack.c.h.b16 %v497
    %v572 = vunpack.c.l.b16 %v498
    %v573 = vunpack.c.h.b16 %v498
    %v574 = vunpack.c.l.b16 %v499
    %v575 = vunpack.c.h.b16 %v499
    %v576 = vunpack.c.l.b16 %v500
    %v577 = vunpack.c.h.b16 %v500
    %v578 = vunpack.c.l.b16 %v501
    %v579 = vunpack.c.h.b16 %v501
    %v580 = vunpack.c.l.b16 %v502
    %v581 = vunpack.c.h.b16 %v502
    %v582 = vunpack.c.l.b16 %v503
    %v583 = vunpack.c.h.b16 %v503
    %v584 = vunpack.c.l.b16 %v504
    %v585 = vunpack.c.h.b16 %v504
    %v586 = vunpack.c.l.b16 %v505
    %v587 = vunpack.c.h.b16 %v505
    %v588 = vunpack.c.l.b16 %v506
    %v589 = vunpack.c.h.b16 %v506
    %v590 = vunpack.c.l.b16 %v507
    %v591 = vunpack.c.h.b16 %v507
    %v592 = vunpack.c.l.b16 %v508
    %v593 = vunpack.c.h.b16 %v508
    %v594 = vunpack.c.l.b16 %v509
    %v595 = vunpack.c.h.b16 %v509
    %v596 = vunpack.c.l.b16 %v510
    %v597 = vunpack.c.h.b16 %v510
    %v598 = vunpack.c.l.b16 %v511
    %v599 = vunpack.c.h.b16 %v511
    %v600 = vunpack.c.l.b16 %v512
    %v601 = vunpack.c.h.b16 %v512
    %v602 = vunpack.c.l.b16 %v513
    %v603 = vunpack.c.h.b16 %v513
    %v604 = vunpack.c.l.b16 %v514
    %v605 = vunpack.c.h.b16 %v514
    %v606 = vunpack.c.l.b16 %v515
    %v607 = vunpack.c.h.b16 %v515
    %v608 = vunpack.c.l.b16 %v516
    %v609 = vunpack.c.h.b16 %v516
    %v610 = vunpack.c.l.b16 %v517
    %v611 = vunpack.c.h.b16 %v517
    %v612 = vunpack.c.l.b16 %v518
    %v613 = vunpack.c.h.b16 %v518
    %v614 = vunpack.c.l.b16 %v519
    %v615 = vunpack.c.h.b16 %v519
    %v616 = vpack.c.b16 %v556, %v552
    %v617 = vpack.c.b16 %v557, %v553
    %v618 = vpack.c.b16 %v558, %v554
    %v619 = vpack.c.b16 %v559, %v555
    %v620 = vpack.c.b16 %v564, %v560
    %v621 = vpack.c.b16 %v565, %v561
    %v622 = vpack.c.b16 %v566, %v562
    %v623 = vpack.c.b16 %v567, %v563
    %v624 = vpack.c.b16 %v572, %v568
    %v625 = vpack.c.b16 %v573, %v569
    %v626 = vpack.c.b16 %v574, %v570
    %v627 = vpack.c.b16 %v575, %v571
    %v628 = vpack.c.b16 %v580, %v576
    %v629 = vpack.c.b16 %v581, %v577
    %v630 = vpack.c.b16 %v582, %v578
    %v631 = vpack.c.b16 %v583, %v579
    %v632 = vpack.c.b16 %v588, %v584
    %v633 = vpack.c.b16 %v589, %v585
    %v634 = vpack.c.b16 %v590, %v586
    %v635 = vpack.c.b16 %v591, %v587
    %v636 = vpack.c.b16 %v596, %v592
    %v637 = vpack.c.b16 %v597, %v593
    %v638 = vpack.c.b16 %v598, %v594
    %v639 = vpack.c.b16 %v599, %v595
    %v640 = vpack.c.b16 %v604, %v600
    %v641 = vpack.c.b16 %v605, %v601
    %v642 = vpack.c.b16 %v606, %v602
    %v643 = vpack.c.b16 %v607, %v603
    %v644 = vpack.c.b16 %v612, %v608
    %v645 = vpack.c.b16 %v613, %v609
    %v646 = vpack.c.b16 %v614, %v610
    %v647 = vpack.c.b16 %v615, %v611
    %680 = vmatprep.subr.bf16.mxu0 %v617
    %681 = vmatpush1.bf16.msra.mxu0 %v616
    %682 = vmatprep.subr.bf16.mxu0 %v621
    %683 = vmatpush1.bf16.msra.mxu0 %v620
    %684 = vmatprep.subr.bf16.mxu0 %v625
    %685 = vmatpush1.bf16.msra.mxu0 %v624
    %686 = vmatprep.subr.bf16.mxu0 %v629
    %687 = vmatpush1.bf16.msra.mxu0 %v628
    %688 = vmatprep.subr.bf16.mxu0 %v633
    %689 = vmatpush1.bf16.msra.mxu0 %v632
    %690 = vmatprep.subr.bf16.mxu0 %v637
    %691 = vmatpush1.bf16.msra.mxu0 %v636
    %692 = vmatprep.subr.bf16.mxu0 %v641
    %693 = vmatpush1.bf16.msra.mxu0 %v640
    %694 = vmatprep.subr.bf16.mxu0 %v645
    %695 = vmatpush1.bf16.msra.mxu0 %v644
    %696 = vmatprep.subr.bf16.mxu0 0
    %697 = vmatpush1.bf16.msra.mxu0 0
    %698 = vmatprep.subr.bf16.mxu0 0
    %699 = vmatpush1.bf16.msra.mxu0 0
    %700 = vmatprep.subr.bf16.mxu0 0
    %701 = vmatpush1.bf16.msra.mxu0 0
    %702 = vmatprep.subr.bf16.mxu0 0
    %703 = vmatpush1.bf16.msra.mxu0 0
    %704 = vmatprep.subr.bf16.mxu0 0
    %705 = vmatpush1.bf16.msra.mxu0 0
    %706 = vmatprep.subr.bf16.mxu0 0
    %707 = vmatpush1.bf16.msra.mxu0 0
    %708 = vmatprep.subr.bf16.mxu0 0
    %709 = vmatpush1.bf16.msra.mxu0 0
    %710 = vmatprep.subr.bf16.mxu0 0
    %711 = vmatpush1.bf16.msra.mxu0 0
    %712 = vmatprep.mubr.bf16.mxu0 0
    %713 = vmatmul.mubr.bf16.gmra.mrb[0].mxu0 %v487
    %v714 = vpop.f32.mrb[0].mxu0
    %v715 = vadd.f32 0.0, %v714
    %v716 = vpop.f32.mrb[0].mxu0
    %v717 = vadd.f32 0.0, %v716
    %v718 = vpop.f32.mrb[0].mxu0
    %v719 = vpop.f32.mrb[0].mxu0
    %720 = vdwg.mxu0
    %721 = vmatprep.subr.bf16.mxu0 %v619
    %722 = vmatpush1.bf16.msra.mxu0 %v618
    %723 = vmatprep.subr.bf16.mxu0 %v623
    %724 = vmatpush1.bf16.msra.mxu0 %v622
    %725 = vmatprep.subr.bf16.mxu0 %v627
    %726 = vmatpush1.bf16.msra.mxu0 %v626
    %727 = vmatprep.subr.bf16.mxu0 %v631
    %728 = vmatpush1.bf16.msra.mxu0 %v630
    %729 = vmatprep.subr.bf16.mxu0 %v635
    %730 = vmatpush1.bf16.msra.mxu0 %v634
    %731 = vmatprep.subr.bf16.mxu0 %v639
    %732 = vmatpush1.bf16.msra.mxu0 %v638
    %733 = vmatprep.subr.bf16.mxu0 %v643
    %734 = vmatpush1.bf16.msra.mxu0 %v642
    %735 = vmatprep.subr.bf16.mxu0 %v647
    %736 = vmatpush1.bf16.msra.mxu0 %v646
    %737 = vmatprep.subr.bf16.mxu0 0
    %738 = vmatpush1.bf16.msra.mxu0 0
    %739 = vmatprep.subr.bf16.mxu0 0
    %740 = vmatpush1.bf16.msra.mxu0 0
    %741 = vmatprep.subr.bf16.mxu0 0
    %742 = vmatpush1.bf16.msra.mxu0 0
    %743 = vmatprep.subr.bf16.mxu0 0
    %744 = vmatpush1.bf16.msra.mxu0 0
    %745 = vmatprep.subr.bf16.mxu0 0
    %746 = vmatpush1.bf16.msra.mxu0 0
    %747 = vmatprep.subr.bf16.mxu0 0
    %748 = vmatpush1.bf16.msra.mxu0 0
    %749 = vmatprep.subr.bf16.mxu0 0
    %750 = vmatpush1.bf16.msra.mxu0 0
    %751 = vmatprep.subr.bf16.mxu0 0
    %752 = vmatpush1.bf16.msra.mxu0 0
    %753 = vmatprep.mubr.bf16.mxu0 0
    %754 = vmatmul.mubr.bf16.gmra.mrb[0].mxu0 %v487
    %v755 = vpop.f32.mrb[0].mxu0
    %v756 = vadd.f32 0.0, %v755
    %v757 = vpop.f32.mrb[0].mxu0
    %v758 = vadd.f32 0.0, %v757
    %v759 = vpop.f32.mrb[0].mxu0
    %v760 = vpop.f32.mrb[0].mxu0
    %761 = vdwg.mxu0
    %v762 = vadd.f32 %v482, %v715
    %v763 = vadd.f32 %v483, %v717
    %v764 = vadd.f32 %v484, %v756
    %v765 = vadd.f32 %v485, %v758
    %v766 = vxor.u32 %v762, 2147483648
    %v767 = vmul.f32 %v766, 1.442695
    %v768 = vpow.pop %v767
    %v769 = vadd.f32 %v768, 1.0
    %v770 = vrcp.pop %v769
    %v771 = vmul.f32 1.0, %v770
    %v772 = vxor.u32 %v763, 2147483648
    %v773 = vmul.f32 %v772, 1.442695
    %v774 = vpow.pop %v773
    %v775 = vadd.f32 %v774, 1.0
    %v776 = vrcp.pop %v775
    %v777 = vmul.f32 1.0, %v776
    %v778 = vtanh.pop %v764
    %v779 = vxor.u32 %v765, 2147483648
    %v780 = vmul.f32 %v779, 1.442695
    %v781 = vpow.pop %v780
    %v782 = vadd.f32 %v781, 1.0
    %v783 = vrcp.pop %v782
    %v784 = vmul.f32 1.0, %v783
    %v785 = vld [vmem:[#allocation3] sm:$0xff]
    %v786 = vmul.f32 %v777, %v785
    %v787 = vmul.f32 %v771, %v778
    %v788 = vadd.f32 %v786, %v787
    %v789 = vtanh.pop %v788
    %v790 = vmul.f32 %v784, %v789
    %791 = vst [vmem:[#allocation3] sm:$0xff] %v788
    %792 = vst [vmem:[#allocation2] sm:$0xff] %v790
    %v793 = vpack.c.bf16 %v790, %v790
    %s794 = smul.addr %s474, 4
    %s795 = scalar_lea.vmem %s4, %s794
    %796 = vst [vmem:[%s795] sm:$0xf] %v793
  $region26: #{cnn_to_rnn_forward.7} parent=0 // loop_footer
    %s478 = sadd.s32 1, %s474
  $region27: #{cnn_to_rnn_forward.7} parent=0 // loop_footer_branch
    %473 = sbr.rel target = $region23
  $region28: #{cnn_to_rnn_forward.7} parent=0 // loop_exit
    _
  // Predicated region
  $region29: #{cnn_to_rnn_forward.7} parent=0 // pred_check
    _
  $region30: #{cnn_to_rnn_forward.7} parent=0 // pred_check_branch
    %798 = sbr.rel (0) target = $region32
  $region31: #{cnn_to_rnn_forward.7} parent=0 // pred_region
    _
  $region32: #{cnn_to_rnn_forward.7} parent=0 // pred_fallthru
    _
  // Predicated region
  $region33: #{cnn_to_rnn_forward.7} parent=0 // pred_check
    _
  $region34: #{cnn_to_rnn_forward.7} parent=0 // pred_check_branch
    %800 = sbr.rel (0) target = $region36
  $region35: #{cnn_to_rnn_forward.7} parent=0 // pred_region
    _
  $region36: #{cnn_to_rnn_forward.7} parent=0 // pred_fallthru
    _

// kernel: cnn_to_rnn_forward.5
$region0: #{cnn_to_rnn_forward.5}
  #allocation0 [shape = 'u32[]', space=smem, size = 0x4, offset = 0x4, fixed_abs, tag = 'smem constant byte address 0x4 - core index']
  #allocation1 [shape = 'u32[144,128]{1,0:T(1,128)}', space=vmem, size = 0x12000, scoped, tag = 'internal scratch']
  #allocation2 [shape = 'f32[8,512]{1,0:T(8,128)}', space=vmem, size = 0x4000, scoped, tag = 'scratch operand']
  %s0 = inlined_call_operand.vmem [shape: bf16[8,768], index: 0, kind: input, shape index: {}]
  %s1 = inlined_call_operand.hbm [shape: bf16[768,2048], index: 1, kind: input, shape index: {}]
  %s2 = inlined_call_operand.hbm [shape: f32[1,2048], index: 2, kind: input, shape index: {}]
  %s3 = inlined_call_operand.vmem [shape: bf16[8,2048], index: 3, kind: output, shape index: {}]
  %s4 = sld [smem:[#allocation0]]
  $region61: #{cnn_to_rnn_forward.5} parent=0
    _
  %s6 = ssub.s32 1, %s4
  %s7 = scalar_select 0, %s6, %s4
  $region1: #{cnn_to_rnn_forward.5} parent=0
    #allocation3 [shape = 'u8[786432]{0}', space=vmem, size = 0xc0000, scoped, tag = 'input window, operand 1']
    #allocation4 [shape = 's32[2]{0}', space=sflag, size = 0x8, scoped, tag = 'scoped memory for cnn_to_rnn_forward.5']
    #allocation5 [shape = 'u8[4096]{0}', space=vmem, size = 0x1000, scoped, tag = 'input window, operand 2']
    #allocation6 [shape = 's32[2]{0}', space=sflag, size = 0x8, scoped, tag = 'scoped memory for cnn_to_rnn_forward.5']
    %8 = vsyncpa [#allocation4], 0
    %s9 = scalar_lea.sflag [#allocation4], 1
    %10 = vsyncpa %s9, 0
    %11 = vsyncpa [#allocation6], 0
    %s12 = scalar_lea.sflag [#allocation6], 1
    %13 = vsyncpa %s12, 0
    loop: start=0, step=1, limit=10
    $region2: #{cnn_to_rnn_forward.5} parent=1 // loop_pre_header
      _
    $region3: #{cnn_to_rnn_forward.5} parent=1 // loop_header
      %s15 = sphi 0, %s19
      %p16 = scmp.ge.s32.totalorder %s15, 10
      %s22 = sphi 0, %s41
      %s23 = sphi 0, %s37
      %s24 = sphi 0, %s33
      %s25 = sphi 0, %s22
      %s26 = sphi 0, %s23
      %s27 = sphi 0, %s24
      %s28 = sphi 0, %s25
      %s29 = sphi 0, %s26
      %s30 = sphi 0, %s27
      %s46 = sphi 0, %s48
      %s49 = sphi 0, %s46
      %s50 = sphi 0, %s49
      %s66 = sphi 0, %s50
      %s74 = sphi 0, %s76
      %s77 = sphi 0, %s74
      %s78 = sphi 0, %s77
      %s94 = sphi 0, %s78
      %s100 = sphi 0, %s102
      %s103 = sphi 0, %s100
      %s104 = sphi 0, %s103
      %s120 = sphi 0, %s104
      %s128 = sphi 0, %s130
      %s131 = sphi 0, %s128
      %s132 = sphi 0, %s131
      %s148 = sphi 0, %s132
    $region4: #{cnn_to_rnn_forward.5} parent=1 // loop_header_branch
      %18 = sbr.rel (%p16) target = $region8
    $region5: #{cnn_to_rnn_forward.5} parent=1 // loop_body
      %s20 = ssub.s32 %s15, 1
      %s21 = ssub.s32 %s15, 2
      %s31 = sadd.s32 1, %s24
      %p32 = scmp.ge.s32.totalorder %s31, 2
      %s33 = scalar_select %p32, 0, %s31
      %s34 = sadd.s32 1, %s23
      %s35 = scalar_select %p32, %s34, %s23
      %p36 = scmp.ge.s32.totalorder %s35, 4
      %s37 = scalar_select %p36, 0, %s35
      %s38 = sadd.s32 1, %s22
      %s39 = scalar_select %p36, %s38, %s22
      %p40 = scmp.ge.s32.totalorder %s39, 1
      %s41 = scalar_select %p40, 0, %s39
      %s42 = ssub.s32 %s22, %s41
      %s43 = ssub.s32 %s24, %s33
      %s44 = sor.u32 %s42, %s43
      %p45 = scmp.eq.s32.totalorder %s44, 0
      %s47 = sadd.s32 %s46, 1
      %s48 = scalar_select %p45, %s46, %s47
      %p51 = pneg %p45
      %p52 = scmp.eq.s32.totalorder %s15, 7
      %p53 = por %p51, %p52
      %p54 = scmp.ne.s32.totalorder %s46, %s49
      %p55 = scmp.eq.s32.totalorder %s15, 0
      %p56 = por %p54, %p55
      %p57 = scmp.ne.s32.totalorder %s46, %s49
      %p58 = scmp.eq.s32.totalorder %s20, 7
      %p59 = por %p57, %p58
      %p60 = scmp.ne.s32.totalorder %s49, %s50
      %p61 = scmp.eq.s32.totalorder %s20, 0
      %p62 = por %p60, %p61
      %p63 = scmp.ne.s32.totalorder %s49, %s50
      %p64 = scmp.eq.s32.totalorder %s21, 7
      %p65 = por %p63, %p64
      %p67 = scmp.ne.s32.totalorder %s50, %s66
      %p68 = scmp.eq.s32.totalorder %s21, 0
      %p69 = por %p67, %p68
      %s70 = ssub.s32 %s24, %s33
      %s71 = ssub.s32 %s23, %s37
      %s72 = sor.u32 %s70, %s71
      %p73 = scmp.eq.s32.totalorder %s72, 0
      %s75 = sadd.s32 %s74, 1
      %s76 = scalar_select %p73, %s74, %s75
      %p79 = pneg %p73
      %p80 = scmp.eq.s32.totalorder %s15, 7
      %p81 = por %p79, %p80
      %p82 = scmp.ne.s32.totalorder %s74, %s77
      %p83 = scmp.eq.s32.totalorder %s15, 0
      %p84 = por %p82, %p83
      %p85 = scmp.ne.s32.totalorder %s74, %s77
      %p86 = scmp.eq.s32.totalorder %s20, 7
      %p87 = por %p85, %p86
      %p88 = scmp.ne.s32.totalorder %s77, %s78
      %p89 = scmp.eq.s32.totalorder %s20, 0
      %p90 = por %p88, %p89
      %p91 = scmp.ne.s32.totalorder %s77, %s78
      %p92 = scmp.eq.s32.totalorder %s21, 7
      %p93 = por %p91, %p92
      %p95 = scmp.ne.s32.totalorder %s78, %s94
      %p96 = scmp.eq.s32.totalorder %s21, 0
      %p97 = por %p95, %p96
      %s98 = ssub.s32 %s23, %s37
      %p99 = scmp.eq.s32.totalorder %s98, 0
      %s101 = sadd.s32 %s100, 1
      %s102 = scalar_select %p99, %s100, %s101
      %p105 = pneg %p99
      %p106 = scmp.eq.s32.totalorder %s15, 7
      %p107 = por %p105, %p106
      %p108 = scmp.ne.s32.totalorder %s100, %s103
      %p109 = scmp.eq.s32.totalorder %s15, 0
      %p110 = por %p108, %p109
      %p111 = scmp.ne.s32.totalorder %s100, %s103
      %p112 = scmp.eq.s32.totalorder %s20, 7
      %p113 = por %p111, %p112
      %p114 = scmp.ne.s32.totalorder %s103, %s104
      %p115 = scmp.eq.s32.totalorder %s20, 0
      %p116 = por %p114, %p115
      %p117 = scmp.ne.s32.totalorder %s103, %s104
      %p118 = scmp.eq.s32.totalorder %s21, 7
      %p119 = por %p117, %p118
      %p121 = scmp.ne.s32.totalorder %s104, %s120
      %p122 = scmp.eq.s32.totalorder %s21, 0
      %p123 = por %p121, %p122
      %s124 = ssub.s32 %s22, %s41
      %s125 = ssub.s32 %s23, %s37
      %s126 = sor.u32 %s124, %s125
      %p127 = scmp.eq.s32.totalorder %s126, 0
      %s129 = sadd.s32 %s128, 1
      %s130 = scalar_select %p127, %s128, %s129
      %p133 = pneg %p127
      %p134 = scmp.eq.s32.totalorder %s15, 7
      %p135 = por %p133, %p134
      %p136 = scmp.ne.s32.totalorder %s128, %s131
      %p137 = scmp.eq.s32.totalorder %s15, 0
      %p138 = por %p136, %p137
      %p139 = scmp.ne.s32.totalorder %s128, %s131
      %p140 = scmp.eq.s32.totalorder %s20, 7
      %p141 = por %p139, %p140
      %p142 = scmp.ne.s32.totalorder %s131, %s132
      %p143 = scmp.eq.s32.totalorder %s20, 0
      %p144 = por %p142, %p143
      %p145 = scmp.ne.s32.totalorder %s131, %s132
      %p146 = scmp.eq.s32.totalorder %s21, 7
      %p147 = por %p145, %p146
      %p149 = scmp.ne.s32.totalorder %s132, %s148
      %p150 = scmp.eq.s32.totalorder %s21, 0
      %p151 = por %p149, %p150
      %p152 = scmp.le.s32.totalorder 1, %s15
      %p153 = scmp.lt.s32.totalorder %s15, 9
      %p154 = pnand %p152, %p153
      %p155 = pneg %p154
      // Predicated region
      $region9: #{cnn_to_rnn_forward.5} parent=5 // pred_check
        _
      $region10: #{cnn_to_rnn_forward.5} parent=5 // pred_check_branch
        %157 = sbr.rel (%p154) target = $region12
      $region11: #{cnn_to_rnn_forward.5} parent=5 // pred_region
        %s158 = ssub.s32 %s15, 1
      $region12: #{cnn_to_rnn_forward.5} parent=5 // pred_fallthru
        _
      %p159 = scmp.lt.s32.totalorder %s15, 8
      // Predicated region
      $region13: #{cnn_to_rnn_forward.5} parent=5 // pred_check
        %p160 = pneg %p159
      $region14: #{cnn_to_rnn_forward.5} parent=5 // pred_check_branch
        %162 = sbr.rel (%p160) target = $region16
      $region15: #{cnn_to_rnn_forward.5} parent=5 // pred_region
        // Predicated region
        $region17: #{cnn_to_rnn_forward.5} parent=15 // pred_check
          %p163 = pneg %p56
        $region18: #{cnn_to_rnn_forward.5} parent=15 // pred_check_branch
          %165 = sbr.rel (%p163) target = $region20
        $region19: #{cnn_to_rnn_forward.5} parent=15 // pred_region
          %s166 = smul.u32 3, %s24
          %p167 = scmp.lt.s32.totalorder %s22, 0
          %s168 = scalar_select %p167, %s22, 0
          %p169 = scmp.lt.s32.totalorder %s166, 5
          %s170 = scalar_select %p169, %s166, 5
          %s171 = smul.addr %s168, 6
          %s172 = sadd.s32 %s170, %s171
          %s173 = smul.addr %s172, 4
          %s174 = scalar_lea.vmem %s0, %s173
          %s175 = smul.u32 3, %s24
        $region20: #{cnn_to_rnn_forward.5} parent=15 // pred_fallthru
          _
        // Predicated region
        $region21: #{cnn_to_rnn_forward.5} parent=15 // pred_check
          %p176 = pneg %p84
        $region22: #{cnn_to_rnn_forward.5} parent=15 // pred_check_branch
          %178 = sbr.rel (%p176) target = $region24
        $region23: #{cnn_to_rnn_forward.5} parent=15 // pred_region
          %s179 = sand.u32 %s74, 1
          %s180 = scalar_lea.sflag [#allocation4], %s179
          %s181 = sand.u32 %s74, 1
          %s182 = smul.addr %s181, 768
          %s183 = scalar_lea.vmem [#allocation3], %s182
          %s184 = smul.u32 48, %s24
          %s185 = smul.u32 4, %s23
          %s187 = ssub.s32 12288, 12288
          %188 = vsyncadd %s180, %s187
          %s189 = smul.addr %s184, 16
          %s190 = sadd.s32 %s185, %s189
          %s191 = smul.addr %s190, 64
          %s192 = scalar_lea.hbm %s1, %s191
          %s193 = sshll.u32 %s183, 4
          %s194 = int_to_ptr.vmem [resolvable:$true] %s193
          %199 = dma.hbm_to_vmem [thread:$0]  %s192, 12288, %s194, %s180, 1024, 256, 16
        $region24: #{cnn_to_rnn_forward.5} parent=15 // pred_fallthru
          _
        // Predicated region
        $region25: #{cnn_to_rnn_forward.5} parent=15 // pred_check
          %p200 = pneg %p110
        $region26: #{cnn_to_rnn_forward.5} parent=15 // pred_check_branch
          %202 = sbr.rel (%p200) target = $region28
        $region27: #{cnn_to_rnn_forward.5} parent=15 // pred_region
          %s203 = sand.u32 %s100, 1
          %s204 = scalar_lea.sflag [#allocation6], %s203
          %s205 = sand.u32 %s100, 1
          %s206 = smul.addr %s205, 4
          %s207 = scalar_lea.vmem [#allocation5], %s206
          %s208 = smul.u32 4, %s23
          %s210 = ssub.s32 64, 64
          %211 = vsyncadd %s204, %s210
          %s212 = smul.addr %s208, 16
          %s213 = scalar_lea.hbm %s2, %s212
          %s215 = sshll.u32 %s207, 4
          %s216 = int_to_ptr.vmem [resolvable:$true] %s215
          %218 = dma.hbm_to_vmem [thread:$0]  %s213, 64, %s216, %s204
        $region28: #{cnn_to_rnn_forward.5} parent=15 // pred_fallthru
          _
      $region16: #{cnn_to_rnn_forward.5} parent=5 // pred_fallthru
        _
      %p219 = scmp.le.s32.totalorder 1, %s15
      %p220 = scmp.lt.s32.totalorder %s15, 9
      %p221 = pnand %p219, %p220
      %p222 = pneg %p221
      // Predicated region
      $region29: #{cnn_to_rnn_forward.5} parent=5 // pred_check
        _
      $region30: #{cnn_to_rnn_forward.5} parent=5 // pred_check_branch
        %224 = sbr.rel (%p221) target = $region32
      $region31: #{cnn_to_rnn_forward.5} parent=5 // pred_region
        %s225 = ssub.s32 %s15, 1
        %s226 = sand.u32 %s77, 1
        %s227 = scalar_lea.sflag [#allocation4], %s226
        %s228 = sand.u32 %s77, 1
        %s229 = smul.addr %s228, 768
        %s230 = scalar_lea.vmem [#allocation3], %s229
        // Predicated region
        $region33: #{cnn_to_rnn_forward.5} parent=31 // pred_check
          %p231 = pneg %p90
        $region34: #{cnn_to_rnn_forward.5} parent=31 // pred_check_branch
          %233 = sbr.rel (%p231) target = $region36
        $region35: #{cnn_to_rnn_forward.5} parent=31 // pred_region
          %234 = dma.done %s227, 12288
        $region36: #{cnn_to_rnn_forward.5} parent=31 // pred_fallthru
          _
        %s235 = sand.u32 %s103, 1
        %s236 = scalar_lea.sflag [#allocation6], %s235
        %s237 = sand.u32 %s103, 1
        %s238 = smul.addr %s237, 4
        %s239 = scalar_lea.vmem [#allocation5], %s238
        // Predicated region
        $region37: #{cnn_to_rnn_forward.5} parent=31 // pred_check
          %p240 = pneg %p116
        $region38: #{cnn_to_rnn_forward.5} parent=31 // pred_check_branch
          %242 = sbr.rel (%p240) target = $region40
        $region39: #{cnn_to_rnn_forward.5} parent=31 // pred_region
          %243 = dma.done %s236, 64
        $region40: #{cnn_to_rnn_forward.5} parent=31 // pred_fallthru
          _
        %s244 = smul.u32 3, %s27
        %p245 = scmp.lt.s32.totalorder %s25, 0
        %s246 = scalar_select %p245, %s25, 0
        %p247 = scmp.lt.s32.totalorder %s244, 5
        %s248 = scalar_select %p247, %s244, 5
        %s249 = smul.addr %s246, 6
        %s250 = sadd.s32 %s248, %s249
        %s251 = smul.addr %s250, 4
        %s252 = scalar_lea.vmem %s0, %s251
        %p253 = pneg %p62
        %p254 = pneg %p59
        %s255 = sand.u32 %s77, 1
        %s256 = scalar_lea.sflag [#allocation4], %s255
        %s257 = sand.u32 %s77, 1
        %s258 = smul.addr %s257, 768
        %s259 = scalar_lea.vmem [#allocation3], %s258
        %p260 = pneg %p90
        %p261 = pneg %p87
        %s262 = sand.u32 %s103, 1
        %s263 = scalar_lea.sflag [#allocation6], %s262
        %s264 = sand.u32 %s103, 1
        %s265 = smul.addr %s264, 4
        %s266 = scalar_lea.vmem [#allocation5], %s265
        %p267 = pneg %p116
        %p268 = pneg %p113
        %p269 = pneg %p144
        %p270 = pneg %p141
        %s271 = smul.u32 4, %s26
        %p272 = scmp.lt.s32.totalorder %s25, 0
        %s273 = scalar_select %p272, %s25, 0
        %p274 = scmp.lt.s32.totalorder %s271, 15
        %s275 = scalar_select %p274, %s271, 15
        %s276 = smul.addr %s273, 16
        %s277 = sadd.s32 %s275, %s276
        %s278 = smul.addr %s277, 4
        %s279 = scalar_lea.vmem %s3, %s278
        %s280 = smul.u32 3, %s27
        %p281 = scmp.lt.s32.totalorder %s25, 0
        %s282 = scalar_select %p281, %s25, 0
        %p283 = scmp.lt.s32.totalorder %s280, 5
        %s284 = scalar_select %p283, %s280, 5
        %s285 = smul.addr %s282, 6
        %s286 = sadd.s32 %s284, %s285
        %s287 = smul.addr %s286, 4
        %s288 = scalar_lea.vmem %s0, %s287
        %s289 = smul.u32 3, %s27
        %s290 = smul.u32 48, %s27
        %s291 = smul.u32 4, %s26
        %s292 = smul.u32 4, %s26
        %s293 = smul.u32 4, %s26
        %p294 = scmp.lt.s32.totalorder %s25, 0
        %s295 = scalar_select %p294, %s25, 0
        %p296 = scmp.lt.s32.totalorder %s293, 15
        %s297 = scalar_select %p296, %s293, 15
        %s298 = smul.addr %s295, 16
        %s299 = sadd.s32 %s297, %s298
        %s300 = smul.addr %s299, 4
        %s301 = scalar_lea.vmem %s3, %s300
        %s302 = smul.u32 4, %s26
        %p304 = scmp.eq.s32.totalorder %s27, 0
        // Predicated region
        $region41: #{cnn_to_rnn_forward.5} parent=31 // pred_check
          %p305 = pneg %p304
        $region42: #{cnn_to_rnn_forward.5} parent=31 // pred_check_branch
          %307 = sbr.rel (%p305) target = $region44
        $region43: #{cnn_to_rnn_forward.5} parent=31 // pred_region
          %308 = vst [vmem:[#allocation2] sm:$0xff] 0.0
          %309 = vst [vmem:[#allocation2 + $0x8] sm:$0xff] 0.0
          %310 = vst [vmem:[#allocation2 + $0x10] sm:$0xff] 0.0
          %311 = vst [vmem:[#allocation2 + $0x18] sm:$0xff] 0.0
        $region44: #{cnn_to_rnn_forward.5} parent=31 // pred_fallthru
          _
        %v312 = vld [vmem:[#allocation2] sm:$0xff]
        %v313 = vld [vmem:[#allocation2 + $0x8] sm:$0xff]
        %v314 = vld [vmem:[#allocation2 + $0x10] sm:$0xff]
        %v315 = vld [vmem:[#allocation2 + $0x18] sm:$0xff]
        %v316 = vld [vmem:[%s288] sm:$0xff]
        %v317 = vld [vmem:[%s288 + $0x8] sm:$0xf]
        %v318 = vld [vmem:[%s230] sm:$0xff]
        %v319 = vld [vmem:[%s230 + $0x8] sm:$0xff]
        %v320 = vld [vmem:[%s230 + $0x10] sm:$0xff]
        %v321 = vld [vmem:[%s230 + $0x18] sm:$0xff]
        %v322 = vld [vmem:[%s230 + $0x20] sm:$0xff]
        %v323 = vld [vmem:[%s230 + $0x28] sm:$0xff]
        %v324 = vld [vmem:[%s230 + $0x30] sm:$0xff]
        %v325 = vld [vmem:[%s230 + $0x38] sm:$0xff]
        %v326 = vld [vmem:[%s230 + $0x40] sm:$0xff]
        %v327 = vld [vmem:[%s230 + $0x48] sm:$0xff]
        %v328 = vld [vmem:[%s230 + $0x50] sm:$0xff]
        %v329 = vld [vmem:[%s230 + $0x58] sm:$0xff]
        %v330 = vld [vmem:[%s230 + $0x60] sm:$0xff]
        %v331 = vld [vmem:[%s230 + $0x68] sm:$0xff]
        %v332 = vld [vmem:[%s230 + $0x70] sm:$0xff]
        %v333 = vld [vmem:[%s230 + $0x78] sm:$0xff]
        %v334 = vld [vmem:[%s230 + $0x80] sm:$0xff]
        %v335 = vld [vmem:[%s230 + $0x88] sm:$0xff]
        %v336 = vld [vmem:[%s230 + $0x90] sm:$0xff]
        %v337 = vld [vmem:[%s230 + $0x98] sm:$0xff]
        %v338 = vld [vmem:[%s230 + $0xa0] sm:$0xff]
        %v339 = vld [vmem:[%s230 + $0xa8] sm:$0xff]
        %v340 = vld [vmem:[%s230 + $0xb0] sm:$0xff]
        %v341 = vld [vmem:[%s230 + $0xb8] sm:$0xff]
        %v342 = vld [vmem:[%s230 + $0xc0] sm:$0xff]
        %v343 = vld [vmem:[%s230 + $0xc8] sm:$0xff]
        %v344 = vld [vmem:[%s230 + $0xd0] sm:$0xff]
        %v345 = vld [vmem:[%s230 + $0xd8] sm:$0xff]
        %v346 = vld [vmem:[%s230 + $0xe0] sm:$0xff]
        %v347 = vld [vmem:[%s230 + $0xe8] sm:$0xff]
        %v348 = vld [vmem:[%s230 + $0xf0] sm:$0xff]
        %v349 = vld [vmem:[%s230 + $0xf8] sm:$0xff]
        %v350 = vld [vmem:[%s230 + $0x100] sm:$0xff]
        %v351 = vld [vmem:[%s230 + $0x108] sm:$0xff]
        %v352 = vld [vmem:[%s230 + $0x110] sm:$0xff]
        %v353 = vld [vmem:[%s230 + $0x118] sm:$0xff]
        %v354 = vld [vmem:[%s230 + $0x120] sm:$0xff]
        %v355 = vld [vmem:[%s230 + $0x128] sm:$0xff]
        %v356 = vld [vmem:[%s230 + $0x130] sm:$0xff]
        %v357 = vld [vmem:[%s230 + $0x138] sm:$0xff]
        %v358 = vld [vmem:[%s230 + $0x140] sm:$0xff]
        %v359 = vld [vmem:[%s230 + $0x148] sm:$0xff]
        %v360 = vld [vmem:[%s230 + $0x150] sm:$0xff]
        %v361 = vld [vmem:[%s230 + $0x158] sm:$0xff]
        %v362 = vld [vmem:[%s230 + $0x160] sm:$0xff]
        %v363 = vld [vmem:[%s230 + $0x168] sm:$0xff]
        %v364 = vld [vmem:[%s230 + $0x170] sm:$0xff]
        %v365 = vld [vmem:[%s230 + $0x178] sm:$0xff]
        %v366 = vld [vmem:[%s230 + $0x180] sm:$0xff]
        %v367 = vld [vmem:[%s230 + $0x188] sm:$0xff]
        %v368 = vld [vmem:[%s230 + $0x190] sm:$0xff]
        %v369 = vld [vmem:[%s230 + $0x198] sm:$0xff]
        %v370 = vld [vmem:[%s230 + $0x1a0] sm:$0xff]
        %v371 = vld [vmem:[%s230 + $0x1a8] sm:$0xff]
        %v372 = vld [vmem:[%s230 + $0x1b0] sm:$0xff]
        %v373 = vld [vmem:[%s230 + $0x1b8] sm:$0xff]
        %v374 = vld [vmem:[%s230 + $0x1c0] sm:$0xff]
        %v375 = vld [vmem:[%s230 + $0x1c8] sm:$0xff]
        %v376 = vld [vmem:[%s230 + $0x1d0] sm:$0xff]
        %v377 = vld [vmem:[%s230 + $0x1d8] sm:$0xff]
        %v378 = vld [vmem:[%s230 + $0x1e0] sm:$0xff]
        %v379 = vld [vmem:[%s230 + $0x1e8] sm:$0xff]
        %v380 = vld [vmem:[%s230 + $0x1f0] sm:$0xff]
        %v381 = vld [vmem:[%s230 + $0x1f8] sm:$0xff]
        %v382 = vld [vmem:[%s230 + $0x200] sm:$0xff]
        %v383 = vld [vmem:[%s230 + $0x208] sm:$0xff]
        %v384 = vld [vmem:[%s230 + $0x210] sm:$0xff]
        %v385 = vld [vmem:[%s230 + $0x218] sm:$0xff]
        %v386 = vld [vmem:[%s230 + $0x220] sm:$0xff]
        %v387 = vld [vmem:[%s230 + $0x228] sm:$0xff]
        %v388 = vld [vmem:[%s230 + $0x230] sm:$0xff]
        %v389 = vld [vmem:[%s230 + $0x238] sm:$0xff]
        %v390 = vld [vmem:[%s230 + $0x240] sm:$0xff]
        %v391 = vld [vmem:[%s230 + $0x248] sm:$0xff]
        %v392 = vld [vmem:[%s230 + $0x250] sm:$0xff]
        %v393 = vld [vmem:[%s230 + $0x258] sm:$0xff]
        %v394 = vld [vmem:[%s230 + $0x260] sm:$0xff]
        %v395 = vld [vmem:[%s230 + $0x268] sm:$0xff]
        %v396 = vld [vmem:[%s230 + $0x270] sm:$0xff]
        %v397 = vld [vmem:[%s230 + $0x278] sm:$0xff]
        %v398 = vld [vmem:[%s230 + $0x280] sm:$0xff]
        %v399 = vld [vmem:[%s230 + $0x288] sm:$0xff]
        %v400 = vld [vmem:[%s230 + $0x290] sm:$0xff]
        %v401 = vld [vmem:[%s230 + $0x298] sm:$0xff]
        %v402 = vld [vmem:[%s230 + $0x2a0] sm:$0xff]
        %v403 = vld [vmem:[%s230 + $0x2a8] sm:$0xff]
        %v404 = vld [vmem:[%s230 + $0x2b0] sm:$0xff]
        %v405 = vld [vmem:[%s230 + $0x2b8] sm:$0xff]
        %v406 = vld [vmem:[%s230 + $0x2c0] sm:$0xff]
        %v407 = vld [vmem:[%s230 + $0x2c8] sm:$0xff]
        %v408 = vld [vmem:[%s230 + $0x2d0] sm:$0xff]
        %v409 = vld [vmem:[%s230 + $0x2d8] sm:$0xff]
        %v410 = vld [vmem:[%s230 + $0x2e0] sm:$0xff]
        %v411 = vld [vmem:[%s230 + $0x2e8] sm:$0xff]
        %v412 = vld [vmem:[%s230 + $0x2f0] sm:$0xff]
        %v413 = vld [vmem:[%s230 + $0x2f8] sm:$0xff]
        %v416 = vunpack.c.l.b16 %v316
        %v417 = vunpack.c.h.b16 %v316
        %v418 = vunpack.c.l.b16 %v317
        %v419 = vpack.c.b16 %v416, %v416
        %v420 = vpack.c.b16 %v417, %v417
        %v421 = vpack.c.b16 %v418, %v418
        %v521 = vunpack.c.l.b16 %v318
        %v522 = vunpack.c.h.b16 %v318
        %v523 = vunpack.c.l.b16 %v319
        %v524 = vunpack.c.h.b16 %v319
        %v525 = vunpack.c.l.b16 %v320
        %v526 = vunpack.c.h.b16 %v320
        %v527 = vunpack.c.l.b16 %v321
        %v528 = vunpack.c.h.b16 %v321
        %v529 = vunpack.c.l.b16 %v322
        %v530 = vunpack.c.h.b16 %v322
        %v531 = vunpack.c.l.b16 %v323
        %v532 = vunpack.c.h.b16 %v323
        %v533 = vunpack.c.l.b16 %v324
        %v534 = vunpack.c.h.b16 %v324
        %v535 = vunpack.c.l.b16 %v325
        %v536 = vunpack.c.h.b16 %v325
        %v537 = vunpack.c.l.b16 %v326
        %v538 = vunpack.c.h.b16 %v326
        %v539 = vunpack.c.l.b16 %v327
        %v540 = vunpack.c.h.b16 %v327
        %v541 = vunpack.c.l.b16 %v328
        %v542 = vunpack.c.h.b16 %v328
        %v543 = vunpack.c.l.b16 %v329
        %v544 = vunpack.c.h.b16 %v329
        %v545 = vunpack.c.l.b16 %v330
        %v546 = vunpack.c.h.b16 %v330
        %v547 = vunpack.c.l.b16 %v331
        %v548 = vunpack.c.h.b16 %v331
        %v549 = vunpack.c.l.b16 %v332
        %v550 = vunpack.c.h.b16 %v332
        %v551 = vunpack.c.l.b16 %v333
        %v552 = vunpack.c.h.b16 %v333
        %v553 = vunpack.c.l.b16 %v334
        %v554 = vunpack.c.h.b16 %v334
        %v555 = vunpack.c.l.b16 %v335
        %v556 = vunpack.c.h.b16 %v335
        %v557 = vunpack.c.l.b16 %v336
        %v558 = vunpack.c.h.b16 %v336
        %v559 = vunpack.c.l.b16 %v337
        %v560 = vunpack.c.h.b16 %v337
        %v561 = vunpack.c.l.b16 %v338
        %v562 = vunpack.c.h.b16 %v338
        %v563 = vunpack.c.l.b16 %v339
        %v564 = vunpack.c.h.b16 %v339
        %v565 = vunpack.c.l.b16 %v340
        %v566 = vunpack.c.h.b16 %v340
        %v567 = vunpack.c.l.b16 %v341
        %v568 = vunpack.c.h.b16 %v341
        %v569 = vunpack.c.l.b16 %v342
        %v570 = vunpack.c.h.b16 %v342
        %v571 = vunpack.c.l.b16 %v343
        %v572 = vunpack.c.h.b16 %v343
        %v573 = vunpack.c.l.b16 %v344
        %v574 = vunpack.c.h.b16 %v344
        %v575 = vunpack.c.l.b16 %v345
        %v576 = vunpack.c.h.b16 %v345
        %v577 = vunpack.c.l.b16 %v346
        %v578 = vunpack.c.h.b16 %v346
        %v579 = vunpack.c.l.b16 %v347
        %v580 = vunpack.c.h.b16 %v347
        %v581 = vunpack.c.l.b16 %v348
        %v582 = vunpack.c.h.b16 %v348
        %v583 = vunpack.c.l.b16 %v349
        %v584 = vunpack.c.h.b16 %v349
        %v585 = vunpack.c.l.b16 %v350
        %v586 = vunpack.c.h.b16 %v350
        %v587 = vunpack.c.l.b16 %v351
        %v588 = vunpack.c.h.b16 %v351
        %v589 = vunpack.c.l.b16 %v352
        %v590 = vunpack.c.h.b16 %v352
        %v591 = vunpack.c.l.b16 %v353
        %v592 = vunpack.c.h.b16 %v353
        %v593 = vunpack.c.l.b16 %v354
        %v594 = vunpack.c.h.b16 %v354
        %v595 = vunpack.c.l.b16 %v355
        %v596 = vunpack.c.h.b16 %v355
        %v597 = vunpack.c.l.b16 %v356
        %v598 = vunpack.c.h.b16 %v356
        %v599 = vunpack.c.l.b16 %v357
        %v600 = vunpack.c.h.b16 %v357
        %v601 = vunpack.c.l.b16 %v358
        %v602 = vunpack.c.h.b16 %v358
        %v603 = vunpack.c.l.b16 %v359
        %v604 = vunpack.c.h.b16 %v359
        %v605 = vunpack.c.l.b16 %v360
        %v606 = vunpack.c.h.b16 %v360
        %v607 = vunpack.c.l.b16 %v361
        %v608 = vunpack.c.h.b16 %v361
        %v609 = vunpack.c.l.b16 %v362
        %v610 = vunpack.c.h.b16 %v362
        %v611 = vunpack.c.l.b16 %v363
        %v612 = vunpack.c.h.b16 %v363
        %v613 = vunpack.c.l.b16 %v364
        %v614 = vunpack.c.h.b16 %v364
        %v615 = vunpack.c.l.b16 %v365
        %v616 = vunpack.c.h.b16 %v365
        %v617 = vunpack.c.l.b16 %v366
        %v618 = vunpack.c.h.b16 %v366
        %v619 = vunpack.c.l.b16 %v367
        %v620 = vunpack.c.h.b16 %v367
        %v621 = vunpack.c.l.b16 %v368
        %v622 = vunpack.c.h.b16 %v368
        %v623 = vunpack.c.l.b16 %v369
        %v624 = vunpack.c.h.b16 %v369
        %v625 = vunpack.c.l.b16 %v370
        %v626 = vunpack.c.h.b16 %v370
        %v627 = vunpack.c.l.b16 %v371
        %v628 = vunpack.c.h.b16 %v371
        %v629 = vunpack.c.l.b16 %v372
        %v630 = vunpack.c.h.b16 %v372
        %v631 = vunpack.c.l.b16 %v373
        %v632 = vunpack.c.h.b16 %v373
        %v633 = vunpack.c.l.b16 %v374
        %v634 = vunpack.c.h.b16 %v374
        %v635 = vunpack.c.l.b16 %v375
        %v636 = vunpack.c.h.b16 %v375
        %v637 = vunpack.c.l.b16 %v376
        %v638 = vunpack.c.h.b16 %v376
        %v639 = vunpack.c.l.b16 %v377
        %v640 = vunpack.c.h.b16 %v377
        %v641 = vunpack.c.l.b16 %v378
        %v642 = vunpack.c.h.b16 %v378
        %v643 = vunpack.c.l.b16 %v379
        %v644 = vunpack.c.h.b16 %v379
        %v645 = vunpack.c.l.b16 %v380
        %v646 = vunpack.c.h.b16 %v380
        %v647 = vunpack.c.l.b16 %v381
        %v648 = vunpack.c.h.b16 %v381
        %v649 = vunpack.c.l.b16 %v382
        %v650 = vunpack.c.h.b16 %v382
        %v651 = vunpack.c.l.b16 %v383
        %v652 = vunpack.c.h.b16 %v383
        %v653 = vunpack.c.l.b16 %v384
        %v654 = vunpack.c.h.b16 %v384
        %v655 = vunpack.c.l.b16 %v385
        %v656 = vunpack.c.h.b16 %v385
        %v657 = vunpack.c.l.b16 %v386
        %v658 = vunpack.c.h.b16 %v386
        %v659 = vunpack.c.l.b16 %v387
        %v660 = vunpack.c.h.b16 %v387
        %v661 = vunpack.c.l.b16 %v388
        %v662 = vunpack.c.h.b16 %v388
        %v663 = vunpack.c.l.b16 %v389
        %v664 = vunpack.c.h.b16 %v389
        %v665 = vunpack.c.l.b16 %v390
        %v666 = vunpack.c.h.b16 %v390
        %v667 = vunpack.c.l.b16 %v391
        %v668 = vunpack.c.h.b16 %v391
        %v669 = vunpack.c.l.b16 %v392
        %v670 = vunpack.c.h.b16 %v392
        %v671 = vunpack.c.l.b16 %v393
        %v672 = vunpack.c.h.b16 %v393
        %v673 = vunpack.c.l.b16 %v394
        %v674 = vunpack.c.h.b16 %v394
        %v675 = vunpack.c.l.b16 %v395
        %v676 = vunpack.c.h.b16 %v395
        %v677 = vunpack.c.l.b16 %v396
        %v678 = vunpack.c.h.b16 %v396
        %v679 = vunpack.c.l.b16 %v397
        %v680 = vunpack.c.h.b16 %v397
        %v681 = vunpack.c.l.b16 %v398
        %v682 = vunpack.c.h.b16 %v398
        %v683 = vunpack.c.l.b16 %v399
        %v684 = vunpack.c.h.b16 %v399
        %v685 = vunpack.c.l.b16 %v400
        %v686 = vunpack.c.h.b16 %v400
        %v687 = vunpack.c.l.b16 %v401
        %v688 = vunpack.c.h.b16 %v401
        %v689 = vunpack.c.l.b16 %v402
        %v690 = vunpack.c.h.b16 %v402
        %v691 = vunpack.c.l.b16 %v403
        %v692 = vunpack.c.h.b16 %v403
        %v693 = vunpack.c.l.b16 %v404
        %v694 = vunpack.c.h.b16 %v404
        %v695 = vunpack.c.l.b16 %v405
        %v696 = vunpack.c.h.b16 %v405
        %v697 = vunpack.c.l.b16 %v406
        %v698 = vunpack.c.h.b16 %v406
        %v699 = vunpack.c.l.b16 %v407
        %v700 = vunpack.c.h.b16 %v407
        %v701 = vunpack.c.l.b16 %v408
        %v702 = vunpack.c.h.b16 %v408
        %v703 = vunpack.c.l.b16 %v409
        %v704 = vunpack.c.h.b16 %v409
        %v705 = vunpack.c.l.b16 %v410
        %v706 = vunpack.c.h.b16 %v410
        %v707 = vunpack.c.l.b16 %v411
        %v708 = vunpack.c.h.b16 %v411
        %v709 = vunpack.c.l.b16 %v412
        %v710 = vunpack.c.h.b16 %v412
        %v711 = vunpack.c.l.b16 %v413
        %v712 = vunpack.c.h.b16 %v413
        %v713 = vpack.c.b16 %v525, %v521
        %v714 = vpack.c.b16 %v526, %v522
        %v715 = vpack.c.b16 %v527, %v523
        %v716 = vpack.c.b16 %v528, %v524
        %v717 = vpack.c.b16 %v533, %v529
        %v718 = vpack.c.b16 %v534, %v530
        %v719 = vpack.c.b16 %v535, %v531
        %v720 = vpack.c.b16 %v536, %v532
        %v721 = vpack.c.b16 %v541, %v537
        %v722 = vpack.c.b16 %v542, %v538
        %v723 = vpack.c.b16 %v543, %v539
        %v724 = vpack.c.b16 %v544, %v540
        %v725 = vpack.c.b16 %v549, %v545
        %v726 = vpack.c.b16 %v550, %v546
        %v727 = vpack.c.b16 %v551, %v547
        %v728 = vpack.c.b16 %v552, %v548
        %v729 = vpack.c.b16 %v557, %v553
        %v730 = vpack.c.b16 %v558, %v554
        %v731 = vpack.c.b16 %v559, %v555
        %v732 = vpack.c.b16 %v560, %v556
        %v733 = vpack.c.b16 %v565, %v561
        %v734 = vpack.c.b16 %v566, %v562
        %v735 = vpack.c.b16 %v567, %v563
        %v736 = vpack.c.b16 %v568, %v564
        %v737 = vpack.c.b16 %v573, %v569
        %v738 = vpack.c.b16 %v574, %v570
        %v739 = vpack.c.b16 %v575, %v571
        %v740 = vpack.c.b16 %v576, %v572
        %v741 = vpack.c.b16 %v581, %v577
        %v742 = vpack.c.b16 %v582, %v578
        %v743 = vpack.c.b16 %v583, %v579
        %v744 = vpack.c.b16 %v584, %v580
        %v745 = vpack.c.b16 %v589, %v585
        %v746 = vpack.c.b16 %v590, %v586
        %v747 = vpack.c.b16 %v591, %v587
        %v748 = vpack.c.b16 %v592, %v588
        %v749 = vpack.c.b16 %v597, %v593
        %v750 = vpack.c.b16 %v598, %v594
        %v751 = vpack.c.b16 %v599, %v595
        %v752 = vpack.c.b16 %v600, %v596
        %v753 = vpack.c.b16 %v605, %v601
        %v754 = vpack.c.b16 %v606, %v602
        %v755 = vpack.c.b16 %v607, %v603
        %v756 = vpack.c.b16 %v608, %v604
        %v757 = vpack.c.b16 %v613, %v609
        %v758 = vpack.c.b16 %v614, %v610
        %v759 = vpack.c.b16 %v615, %v611
        %v760 = vpack.c.b16 %v616, %v612
        %v761 = vpack.c.b16 %v621, %v617
        %v762 = vpack.c.b16 %v622, %v618
        %v763 = vpack.c.b16 %v623, %v619
        %v764 = vpack.c.b16 %v624, %v620
        %v765 = vpack.c.b16 %v629, %v625
        %v766 = vpack.c.b16 %v630, %v626
        %v767 = vpack.c.b16 %v631, %v627
        %v768 = vpack.c.b16 %v632, %v628
        %v769 = vpack.c.b16 %v637, %v633
        %v770 = vpack.c.b16 %v638, %v634
        %v771 = vpack.c.b16 %v639, %v635
        %v772 = vpack.c.b16 %v640, %v636
        %v773 = vpack.c.b16 %v645, %v641
        %v774 = vpack.c.b16 %v646, %v642
        %v775 = vpack.c.b16 %v647, %v643
        %v776 = vpack.c.b16 %v648, %v644
        %v777 = vpack.c.b16 %v653, %v649
        %v778 = vpack.c.b16 %v654, %v650
        %v779 = vpack.c.b16 %v655, %v651
        %v780 = vpack.c.b16 %v656, %v652
        %v781 = vpack.c.b16 %v661, %v657
        %v782 = vpack.c.b16 %v662, %v658
        %v783 = vpack.c.b16 %v663, %v659
        %v784 = vpack.c.b16 %v664, %v660
        %v785 = vpack.c.b16 %v669, %v665
        %v786 = vpack.c.b16 %v670, %v666
        %v787 = vpack.c.b16 %v671, %v667
        %v788 = vpack.c.b16 %v672, %v668
        %v789 = vpack.c.b16 %v677, %v673
        %v790 = vpack.c.b16 %v678, %v674
        %v791 = vpack.c.b16 %v679, %v675
        %v792 = vpack.c.b16 %v680, %v676
        %v793 = vpack.c.b16 %v685, %v681
        %v794 = vpack.c.b16 %v686, %v682
        %v795 = vpack.c.b16 %v687, %v683
        %v796 = vpack.c.b16 %v688, %v684
        %v797 = vpack.c.b16 %v693, %v689
        %v798 = vpack.c.b16 %v694, %v690
        %v799 = vpack.c.b16 %v695, %v691
        %v800 = vpack.c.b16 %v696, %v692
        %v801 = vpack.c.b16 %v701, %v697
        %v802 = vpack.c.b16 %v702, %v698
        %v803 = vpack.c.b16 %v703, %v699
        %v804 = vpack.c.b16 %v704, %v700
        %v805 = vpack.c.b16 %v709, %v705
        %v806 = vpack.c.b16 %v710, %v706
        %v807 = vpack.c.b16 %v711, %v707
        %v808 = vpack.c.b16 %v712, %v708
        %905 = vmatprep.subr.bf16.mxu0 %v714
        %906 = vmatpush1.bf16.msra.mxu0 %v713
        %907 = vmatprep.subr.bf16.mxu0 %v718
        %908 = vmatpush1.bf16.msra.mxu0 %v717
        %909 = vmatprep.subr.bf16.mxu0 %v722
        %910 = vmatpush1.bf16.msra.mxu0 %v721
        %911 = vmatprep.subr.bf16.mxu0 %v726
        %912 = vmatpush1.bf16.msra.mxu0 %v725
        %913 = vmatprep.subr.bf16.mxu0 %v730
        %914 = vmatpush1.bf16.msra.mxu0 %v729
        %915 = vmatprep.subr.bf16.mxu0 %v734
        %916 = vmatpush1.bf16.msra.mxu0 %v733
        %917 = vmatprep.subr.bf16.mxu0 %v738
        %918 = vmatpush1.bf16.msra.mxu0 %v737
        %919 = vmatprep.subr.bf16.mxu0 %v742
        %920 = vmatpush1.bf16.msra.mxu0 %v741
        %921 = vmatprep.subr.bf16.mxu0 %v746
        %922 = vmatpush1.bf16.msra.mxu0 %v745
        %923 = vmatprep.subr.bf16.mxu0 %v750
        %924 = vmatpush1.bf16.msra.mxu0 %v749
        %925 = vmatprep.subr.bf16.mxu0 %v754
        %926 = vmatpush1.bf16.msra.mxu0 %v753
        %927 = vmatprep.subr.bf16.mxu0 %v758
        %928 = vmatpush1.bf16.msra.mxu0 %v757
        %929 = vmatprep.subr.bf16.mxu0 %v762
        %930 = vmatpush1.bf16.msra.mxu0 %v761
        %931 = vmatprep.subr.bf16.mxu0 %v766
        %932 = vmatpush1.bf16.msra.mxu0 %v765
        %933 = vmatprep.subr.bf16.mxu0 %v770
        %934 = vmatpush1.bf16.msra.mxu0 %v769
        %935 = vmatprep.subr.bf16.mxu0 %v774
        %936 = vmatpush1.bf16.msra.mxu0 %v773
        %937 = vmatprep.mubr.bf16.mxu0 %v420
        %938 = vmatmul.mubr.bf16.gmra.mrb[0].mxu0 %v419
        %v939 = vpop.f32.mrb[0].mxu0
        %v940 = vadd.f32 0.0, %v939
        %v941 = vpop.f32.mrb[0].mxu0
        %v942 = vadd.f32 0.0, %v941
        %v943 = vpop.f32.mrb[0].mxu0
        %v944 = vpop.f32.mrb[0].mxu0
        %945 = vdwg.mxu0
        %946 = vmatprep.subr.bf16.mxu0 %v778
        %947 = vmatpush1.bf16.msra.mxu0 %v777
        %948 = vmatprep.subr.bf16.mxu0 %v782
        %949 = vmatpush1.bf16.msra.mxu0 %v781
        %950 = vmatprep.subr.bf16.mxu0 %v786
        %951 = vmatpush1.bf16.msra.mxu0 %v785
        %952 = vmatprep.subr.bf16.mxu0 %v790
        %953 = vmatpush1.bf16.msra.mxu0 %v789
        %954 = vmatprep.subr.bf16.mxu0 %v794
        %955 = vmatpush1.bf16.msra.mxu0 %v793
        %956 = vmatprep.subr.bf16.mxu0 %v798
        %957 = vmatpush1.bf16.msra.mxu0 %v797
        %958 = vmatprep.subr.bf16.mxu0 %v802
        %959 = vmatpush1.bf16.msra.mxu0 %v801
        %960 = vmatprep.subr.bf16.mxu0 %v806
        %961 = vmatpush1.bf16.msra.mxu0 %v805
        %962 = vmatprep.subr.bf16.mxu0 0
        %963 = vmatpush1.bf16.msra.mxu0 0
        %964 = vmatprep.subr.bf16.mxu0 0
        %965 = vmatpush1.bf16.msra.mxu0 0
        %966 = vmatprep.subr.bf16.mxu0 0
        %967 = vmatpush1.bf16.msra.mxu0 0
        %968 = vmatprep.subr.bf16.mxu0 0
        %969 = vmatpush1.bf16.msra.mxu0 0
        %970 = vmatprep.subr.bf16.mxu0 0
        %971 = vmatpush1.bf16.msra.mxu0 0
        %972 = vmatprep.subr.bf16.mxu0 0
        %973 = vmatpush1.bf16.msra.mxu0 0
        %974 = vmatprep.subr.bf16.mxu0 0
        %975 = vmatpush1.bf16.msra.mxu0 0
        %976 = vmatprep.subr.bf16.mxu0 0
        %977 = vmatpush1.bf16.msra.mxu0 0
        %978 = vmatprep.mubr.bf16.mxu0 0
        %979 = vmatmul.mubr.bf16.gmra.mrb[0].mxu0 %v421
        %v980 = vpop.f32.mrb[0].mxu0
        %v981 = vadd.f32 %v940, %v980
        %v982 = vpop.f32.mrb[0].mxu0
        %v983 = vadd.f32 %v942, %v982
        %v984 = vpop.f32.mrb[0].mxu0
        %v985 = vpop.f32.mrb[0].mxu0
        %986 = vdwg.mxu0
        %987 = vmatprep.subr.bf16.mxu0 %v716
        %988 = vmatpush1.bf16.msra.mxu0 %v715
        %989 = vmatprep.subr.bf16.mxu0 %v720
        %990 = vmatpush1.bf16.msra.mxu0 %v719
        %991 = vmatprep.subr.bf16.mxu0 %v724
        %992 = vmatpush1.bf16.msra.mxu0 %v723
        %993 = vmatprep.subr.bf16.mxu0 %v728
        %994 = vmatpush1.bf16.msra.mxu0 %v727
        %995 = vmatprep.subr.bf16.mxu0 %v732
        %996 = vmatpush1.bf16.msra.mxu0 %v731
        %997 = vmatprep.subr.bf16.mxu0 %v736
        %998 = vmatpush1.bf16.msra.mxu0 %v735
        %999 = vmatprep.subr.bf16.mxu0 %v740
        %1000 = vmatpush1.bf16.msra.mxu0 %v739
        %1001 = vmatprep.subr.bf16.mxu0 %v744
        %1002 = vmatpush1.bf16.msra.mxu0 %v743
        %1003 = vmatprep.subr.bf16.mxu0 %v748
        %1004 = vmatpush1.bf16.msra.mxu0 %v747
        %1005 = vmatprep.subr.bf16.mxu0 %v752
        %1006 = vmatpush1.bf16.msra.mxu0 %v751
        %1007 = vmatprep.subr.bf16.mxu0 %v756
        %1008 = vmatpush1.bf16.msra.mxu0 %v755
        %1009 = vmatprep.subr.bf16.mxu0 %v760
        %1010 = vmatpush1.bf16.msra.mxu0 %v759
        %1011 = vmatprep.subr.bf16.mxu0 %v764
        %1012 = vmatpush1.bf16.msra.mxu0 %v763
        %1013 = vmatprep.subr.bf16.mxu0 %v768
        %1014 = vmatpush1.bf16.msra.mxu0 %v767
        %1015 = vmatprep.subr.bf16.mxu0 %v772
        %1016 = vmatpush1.bf16.msra.mxu0 %v771
        %1017 = vmatprep.subr.bf16.mxu0 %v776
        %1018 = vmatpush1.bf16.msra.mxu0 %v775
        %1019 = vmatprep.mubr.bf16.mxu0 %v420
        %1020 = vmatmul.mubr.bf16.gmra.mrb[0].mxu0 %v419
        %v1021 = vpop.f32.mrb[0].mxu0
        %v1022 = vadd.f32 0.0, %v1021
        %v1023 = vpop.f32.mrb[0].mxu0
        %v1024 = vadd.f32 0.0, %v1023
        %v1025 = vpop.f32.mrb[0].mxu0
        %v1026 = vpop.f32.mrb[0].mxu0
        %1027 = vdwg.mxu0
        %1028 = vmatprep.subr.bf16.mxu0 %v780
        %1029 = vmatpush1.bf16.msra.mxu0 %v779
        %1030 = vmatprep.subr.bf16.mxu0 %v784
        %1031 = vmatpush1.bf16.msra.mxu0 %v783
        %1032 = vmatprep.subr.bf16.mxu0 %v788
        %1033 = vmatpush1.bf16.msra.mxu0 %v787
        %1034 = vmatprep.subr.bf16.mxu0 %v792
        %1035 = vmatpush1.bf16.msra.mxu0 %v791
        %1036 = vmatprep.subr.bf16.mxu0 %v796
        %1037 = vmatpush1.bf16.msra.mxu0 %v795
        %1038 = vmatprep.subr.bf16.mxu0 %v800
        %1039 = vmatpush1.bf16.msra.mxu0 %v799
        %1040 = vmatprep.subr.bf16.mxu0 %v804
        %1041 = vmatpush1.bf16.msra.mxu0 %v803
        %1042 = vmatprep.subr.bf16.mxu0 %v808
        %1043 = vmatpush1.bf16.msra.mxu0 %v807
        %1044 = vmatprep.subr.bf16.mxu0 0
        %1045 = vmatpush1.bf16.msra.mxu0 0
        %1046 = vmatprep.subr.bf16.mxu0 0
        %1047 = vmatpush1.bf16.msra.mxu0 0
        %1048 = vmatprep.subr.bf16.mxu0 0
        %1049 = vmatpush1.bf16.msra.mxu0 0
        %1050 = vmatprep.subr.bf16.mxu0 0
        %1051 = vmatpush1.bf16.msra.mxu0 0
        %1052 = vmatprep.subr.bf16.mxu0 0
        %1053 = vmatpush1.bf16.msra.mxu0 0
        %1054 = vmatprep.subr.bf16.mxu0 0
        %1055 = vmatpush1.bf16.msra.mxu0 0
        %1056 = vmatprep.subr.bf16.mxu0 0
        %1057 = vmatpush1.bf16.msra.mxu0 0
        %1058 = vmatprep.subr.bf16.mxu0 0
        %1059 = vmatpush1.bf16.msra.mxu0 0
        %1060 = vmatprep.mubr.bf16.mxu0 0
        %1061 = vmatmul.mubr.bf16.gmra.mrb[0].mxu0 %v421
        %v1062 = vpop.f32.mrb[0].mxu0
        %v1063 = vadd.f32 %v1022, %v1062
        %v1064 = vpop.f32.mrb[0].mxu0
        %v1065 = vadd.f32 %v1024, %v1064
        %v1066 = vpop.f32.mrb[0].mxu0
        %v1067 = vpop.f32.mrb[0].mxu0
        %1068 = vdwg.mxu0
        %v1069 = vadd.f32 %v312, %v981
        %v1070 = vadd.f32 %v313, %v983
        %v1071 = vadd.f32 %v314, %v1063
        %v1072 = vadd.f32 %v315, %v1065
        %1073 = vst [vmem:[#allocation2] sm:$0xff] %v1069
        %1074 = vst [vmem:[#allocation2 + $0x8] sm:$0xff] %v1070
        %1075 = vst [vmem:[#allocation2 + $0x10] sm:$0xff] %v1071
        %1076 = vst [vmem:[#allocation2 + $0x18] sm:$0xff] %v1072
        %p1077 = scmp.eq.s32.totalorder %s27, 1
        // Predicated region
        $region45: #{cnn_to_rnn_forward.5} parent=31 // pred_check
          %p1078 = pneg %p1077
        $region46: #{cnn_to_rnn_forward.5} parent=31 // pred_check_branch
          %1080 = sbr.rel (%p1078) target = $region48
        $region47: #{cnn_to_rnn_forward.5} parent=31 // pred_region
          %v1081 = vld [vmem:[#allocation2] sm:$0xff]
          %v1082 = vld [vmem:[#allocation2 + $0x8] sm:$0xff]
          %v1083 = vld [vmem:[#allocation2 + $0x10] sm:$0xff]
          %v1084 = vld [vmem:[#allocation2 + $0x18] sm:$0xff]
          %v1085 = vld [vmem:[%s239] sm:$0xf]
          %v1087 = vlaneseq
          %v1088 = vshrl.u32 %v1087, 7
          %v1089 = vsub.s32 0, %v1088
          %v1090 = vrot.slane %v1085, %v1089
          %v1091 = vlaneseq
          %v1092 = vshrl.u32 %v1091, 7
          %v1093 = vsub.s32 1, %v1092
          %v1094 = vrot.slane %v1085, %v1093
          %v1095 = vlaneseq
          %v1096 = vshrl.u32 %v1095, 7
          %v1097 = vsub.s32 2, %v1096
          %v1098 = vrot.slane %v1085, %v1097
          %v1099 = vlaneseq
          %v1100 = vshrl.u32 %v1099, 7
          %v1101 = vsub.s32 3, %v1100
          %v1102 = vrot.slane %v1085, %v1101
          %v1107 = vadd.f32 %v1081, %v1090
          %v1108 = vadd.f32 %v1082, %v1094
          %v1109 = vadd.f32 %v1083, %v1098
          %v1110 = vadd.f32 %v1084, %v1102
          %v1111 = vpack.c.bf16 %v1107, %v1107
          %v1112 = vpack.c.bf16 %v1108, %v1108
          %v1113 = vpack.c.bf16 %v1109, %v1109
          %v1114 = vpack.c.bf16 %v1110, %v1110
          %v1119 = vunpack.c.l.b16 %v1111
          %v1120 = vunpack.c.l.b16 %v1112
          %v1121 = vunpack.c.l.b16 %v1113
          %v1122 = vunpack.c.l.b16 %v1114
          %v1123 = vpack.c.b16 %v1120, %v1119
          %v1124 = vpack.c.b16 %v1122, %v1121
          %1127 = vst [vmem:[%s301] sm:$0xff] %v1123
          %1128 = vst [vmem:[%s301 + $0x8] sm:$0xff] %v1124
        $region48: #{cnn_to_rnn_forward.5} parent=31 // pred_fallthru
          _
        %s1129 = smul.u32 4, %s26
        %p1130 = scmp.lt.s32.totalorder %s25, 0
        %s1131 = scalar_select %p1130, %s25, 0
        %p1132 = scmp.lt.s32.totalorder %s1129, 15
        %s1133 = scalar_select %p1132, %s1129, 15
        %s1134 = smul.addr %s1131, 16
        %s1135 = sadd.s32 %s1133, %s1134
        %s1136 = smul.addr %s1135, 4
        %s1137 = scalar_lea.vmem %s3, %s1136
        // Predicated region
        $region49: #{cnn_to_rnn_forward.5} parent=31 // pred_check
          %p1138 = pneg %p141
        $region50: #{cnn_to_rnn_forward.5} parent=31 // pred_check_branch
          %1140 = sbr.rel (%p1138) target = $region52
        $region51: #{cnn_to_rnn_forward.5} parent=31 // pred_region
          %s1141 = smul.u32 4, %s26
        $region52: #{cnn_to_rnn_forward.5} parent=31 // pred_fallthru
          _
      $region32: #{cnn_to_rnn_forward.5} parent=5 // pred_fallthru
        _
      %p1142 = scmp.le.s32.totalorder 2, %s15
      // Predicated region
      $region53: #{cnn_to_rnn_forward.5} parent=5 // pred_check
        %p1143 = pneg %p1142
      $region54: #{cnn_to_rnn_forward.5} parent=5 // pred_check_branch
        %1145 = sbr.rel (%p1143) target = $region56
      $region55: #{cnn_to_rnn_forward.5} parent=5 // pred_region
        %s1146 = ssub.s32 %s15, 2
        // Predicated region
        $region57: #{cnn_to_rnn_forward.5} parent=55 // pred_check
          %p1147 = pneg %p147
        $region58: #{cnn_to_rnn_forward.5} parent=55 // pred_check_branch
          %1149 = sbr.rel (%p1147) target = $region60
        $region59: #{cnn_to_rnn_forward.5} parent=55 // pred_region
          %s1150 = smul.u32 4, %s29
          %p1151 = scmp.lt.s32.totalorder %s28, 0
          %s1152 = scalar_select %p1151, %s28, 0
          %p1153 = scmp.lt.s32.totalorder %s1150, 15
          %s1154 = scalar_select %p1153, %s1150, 15
          %s1155 = smul.addr %s1152, 16
          %s1156 = sadd.s32 %s1154, %s1155
          %s1157 = smul.addr %s1156, 4
          %s1158 = scalar_lea.vmem %s3, %s1157
        $region60: #{cnn_to_rnn_forward.5} parent=55 // pred_fallthru
          _
      $region56: #{cnn_to_rnn_forward.5} parent=5 // pred_fallthru
        _
    $region6: #{cnn_to_rnn_forward.5} parent=1 // loop_footer
      %s19 = sadd.s32 1, %s15
    $region7: #{cnn_to_rnn_forward.5} parent=1 // loop_footer_branch
      %14 = sbr.rel target = $region3
    $region8: #{cnn_to_rnn_forward.5} parent=1 // loop_exit
      _
    %1159 = vsyncpa [#allocation4], 1
    %s1160 = scalar_lea.sflag [#allocation4], 1
    %1161 = vsyncpa %s1160, 1
    %1162 = vsyncpa [#allocation6], 1
    %s1163 = scalar_lea.sflag [#allocation6], 1
    %1164 = vsyncpa %s1163, 1

</llo_original>
